<compile_context>
chip_gen: v7x
topology: tpu7x:2x2x1
jax: 0.10.0
libtpu: 0.0.40
codegen_flags: <defaults>
</compile_context>

<pallas_src>
import functools

import jax
import jax.numpy as jnp
import numpy as np
from jax.experimental import pallas as pl
from jax.experimental.pallas import tpu as pltpu

BN_EPS = 1e-5


def bottleneck_kernel(*refs, n, h, w, e, cout, stride, pad, shortcut_conv):
    if shortcut_conv:
        (x_ref, xsc_ref, w1bd_ref, dwk_ref, w3bd_ref, wsbd_ref,
         ge_ref, gte_ref, gc_ref, gtc_ref, pp_ref, o_ref, hp_ref) = refs
    else:
        (x_ref, w1bd_ref, dwk_ref, w3bd_ref,
         ge_ref, gte_ref, gc_ref, gtc_ref, pp_ref, o_ref, hp_ref) = refs
        xsc_ref, wsbd_ref = x_ref, None      # identity shortcut aliases the input

    f32 = jnp.float32
    we = w * e
    hp_rows = h + 2 * pad
    ho = (hp_rows - 3) // stride + 1
    wo = (w + 2 * pad - 3) // stride + 1

    # Host-precomputed BN helpers: packed gamma/beta slab + one-hot collapse
    # (lanes -> channels) / tile (channels -> lanes) matrices.
    pp = pp_ref[...]
    ge, gte = ge_ref[...], gte_ref[...]
    g_bn1, g_bn2 = ge[:, :e], ge[:, e:2 * e]
    gt_bn1, gt_bn2 = gte[0:e, :], gte[e:2 * e, :]
    g_bn3, gt_bn3 = gc_ref[...], gtc_ref[...]

    def bn(y2d, gmat, gtmat, gamma, beta, count):
        # Training-mode batch statistics fused into a per-lane scale/shift; the
        # per-channel reduce / re-tile runs as tiny matmuls on the idle MXU.
        s1 = jnp.sum(y2d, axis=0, keepdims=True)
        s2 = jnp.sum(y2d * y2d, axis=0, keepdims=True)
        s1c = jnp.dot(s1, gmat, preferred_element_type=f32)
        s2c = jnp.dot(s2, gmat, preferred_element_type=f32)
        mean = s1c / count
        # TODO(synk): single-pass E[x^2]-mean^2 is fine at these magnitudes;
        # switch to a two-pass (x-mean)^2 if activations grow large.
        var = jnp.maximum(s2c / count - mean * mean, 0.0)
        scale = gamma * jax.lax.rsqrt(var + BN_EPS)              # one EUP rsqrt
        shift = beta - mean * scale
        scale_t = jnp.dot(scale, gtmat, preferred_element_type=f32)
        shift_t = jnp.dot(shift, gtmat, preferred_element_type=f32)
        return y2d * scale_t + shift_t

    # ---- conv1 (1x1 expand): one MXU matmul against a block-diagonal weight.
    h1 = jnp.dot(x_ref[...], w1bd_ref[...], preferred_element_type=f32)   # (n*h, we)
    h1 = bn(h1, g_bn1, gt_bn1, pp[0:1, :e], pp[1:2, :e], float(n * h * w))
    h1 = jnp.clip(h1, 0.0, 6.0)

    # ---- conv2 (3x3 depthwise).  H zero-padding via scratch (only the border
    # rows are zero-filled, interior written once).  W zero-padding / lane
    # shifts: one aligned (zeros | hp | zeros) concat, then the two shifted
    # variants are single 128-lane slices taken once (not per tap).
    hp_ref[:, 0:pad, :] = jnp.zeros((n, pad, we), f32)
    hp_ref[:, pad + h:hp_rows, :] = jnp.zeros((n, pad, we), f32)
    hp_ref[:, pad:pad + h, :] = h1.reshape(n, h, we)
    hp0 = hp_ref[...]                                             # (n, hp_rows, we)
    zpad = jnp.zeros((n, hp_rows, we), f32)
    catz = jnp.concatenate([zpad, hp0, zpad], axis=2)             # (n, hp_rows, 3*we)
    hp_m = catz[:, :, we - e:2 * we - e]     # input col g-1  (kw = 0 taps)
    hp_p = catz[:, :, we + e:2 * we + e]     # input col g+1  (kw = 2 taps)
    shifted = (hp_m, hp0, hp_p)

    dwk = dwk_ref[...]                                            # (9, we)
    row_span = (ho - 1) * stride + 1
    acc = None
    for kw in range(3):
        src = shifted[kw]
        for kh in range(3):
            tap = kh * 3 + kw
            term = src[:, kh:kh + row_span:stride, :] * dwk[tap:tap + 1, :]
            acc = term if acc is None else acc + term
    h2 = acc.reshape(n * ho, we)
    # BN2's collapse matrices only count / re-tile the stride-selected lane
    # groups; unselected groups get zero scale+shift and are dropped by w3_bd.
    h2 = bn(h2, g_bn2, gt_bn2, pp[2:3, :e], pp[3:4, :e], float(n * ho * wo))
    h2 = jnp.clip(h2, 0.0, 6.0)

    # ---- conv3 (1x1 project) + BN3; w3_bd also folds in the stride-W select.
    h3 = jnp.dot(h2.astype(w3bd_ref.dtype), w3bd_ref[...],
                 preferred_element_type=f32)                      # (n*ho, wo*cout)
    h3 = bn(h3, g_bn3, gt_bn3, pp[4:5, :cout], pp[5:6, :cout], float(n * ho * wo))

    # ---- shortcut ----
    if shortcut_conv:
        s0 = jnp.dot(xsc_ref[...], wsbd_ref[...], preferred_element_type=f32)
        sc = bn(s0, g_bn3, gt_bn3, pp[6:7, :cout], pp[7:8, :cout],
                float(n * ho * wo))
    else:
        sc = xsc_ref[...].astype(f32)

    # Lane-dense (n*ho, wo*cout) store -> unmasked full-lane vst.
    o_ref[...] = jnp.clip(h3 + sc, 0.0, 6.0)


def _block_diag(wmat, reps):
    """(Ci, Co) -> block-diagonal (reps*Ci, reps*Co)."""
    ci, co = wmat.shape
    eye = jnp.eye(reps, dtype=wmat.dtype)
    return jnp.einsum("rs,ij->risj", eye, wmat).reshape(reps * ci, reps * co)


def _collapse_mats(groups, chans, selected=None):
    """One-hot lane<->channel maps for a (groups*chans)-lane slab.

    G  (groups*chans, chans): sums each channel over the selected groups.
    GT (chans, groups*chans): tiles per-channel values back onto the selected
    groups (zeros elsewhere)."""
    lanes = groups * chans
    lane_ch = np.arange(lanes) % chans
    lane_grp = np.arange(lanes) // chans
    sel = np.ones(groups, bool) if selected is None else np.asarray(selected, bool)
    g = ((lane_ch[:, None] == np.arange(chans)[None, :]) &
         sel[lane_grp][:, None]).astype(np.float32)
    return jnp.asarray(g), jnp.asarray(g.T)


def bottleneck_forward(x_nhwc, params, *, stride, mxu_dtype=jnp.float32):
    N, H, W, Cin = x_nhwc.shape
    pad = (stride + 1) // 2
    if pad != 1:
        # TODO(synk): stride >= 3 (pad >= 2) needs a wider virtual-W grid.
        raise NotImplementedError("only stride 1 and 2 are supported")
    E = params["w1"].shape[1]
    Cout = params["w3"].shape[1]
    shortcut_conv = (stride != 1) or (Cin != Cout)
    Hp = H + 2 * pad
    Ho = (Hp - 3) // stride + 1
    Wo = (W + 2 * pad - 3) // stride + 1
    WE = W * E
    f32 = jnp.float32

    # Lane-dense input slab (exactly W*Cin lanes, wrapper reshapes are layout
    # plumbing only).
    x_dense = x_nhwc.reshape(N * H, W * Cin).astype(mxu_dtype)

    # 1x1 convs as block-diagonal MXU matmuls.  conv3's weight also folds in
    # the stride-W column selection (no strided lane gather in the kernel).
    # TODO(synk): block-diag weights grow as (width*C)^2; tile W for big widths.
    w1_bd = _block_diag(params["w1"], W).astype(mxu_dtype)           # (W*Cin, W*E)
    sel = np.zeros((W, Wo), np.float32)
    sel[np.arange(Wo) * stride, np.arange(Wo)] = 1.0
    w3_bd = jnp.einsum("ws,ij->wisj", jnp.asarray(sel),
                       params["w3"]).reshape(WE, Wo * Cout).astype(mxu_dtype)

    # Depthwise taps pre-tiled across the lane axis; the W boundary zeros come
    # from the pre-shifted slabs in the kernel, so no lane masks are needed.
    dwk_tiled = jnp.tile(params["dwk"].reshape(9, 1, E),
                         (1, W, 1)).reshape(9, WE).astype(f32)

    # Host-precomputed BN collapse/tile matrices (no in-kernel iota setup).
    g1m, gt1m = _collapse_mats(W, E)
    strided = np.zeros(W, bool)
    strided[np.arange(Wo) * stride] = True
    g2m, gt2m = _collapse_mats(W, E, strided)
    g3m, gt3m = _collapse_mats(Wo, Cout)
    ge = jnp.concatenate([g1m, g2m], axis=1)                         # (W*E, 2E)
    gte = jnp.concatenate([gt1m, gt2m], axis=0)                      # (2E, W*E)

    # All per-channel gamma/beta packed into one (8, max(E, Cout)) slab.
    pmax = max(E, Cout)

    def _row(v, width):
        r = jnp.zeros((1, pmax), f32)
        return r.at[:, :width].set(jnp.asarray(v, f32).reshape(1, width))

    if shortcut_conv:
        gs_, bes_ = params["gs"], params["bes"]
    else:
        gs_, bes_ = jnp.ones((1, Cout), f32), jnp.zeros((1, Cout), f32)
    pp = jnp.concatenate([
        _row(params["g1"], E), _row(params["be1"], E),
        _row(params["g2"], E), _row(params["be2"], E),
        _row(params["g3"], Cout), _row(params["be3"], Cout),
        _row(gs_, Cout), _row(bes_, Cout)], axis=0)                  # (8, pmax)

    if shortcut_conv:
        xs = x_nhwc if stride == 1 else x_nhwc[:, ::stride, ::stride, :]
        xsc_dense = xs.reshape(N * Ho, Wo * Cin).astype(mxu_dtype)
        ws_bd = _block_diag(params["ws"], Wo).astype(mxu_dtype)      # (Wo*Cin, Wo*Cout)
        args = (x_dense, xsc_dense, w1_bd, dwk_tiled, w3_bd, ws_bd,
                ge, gte, g3m, gt3m, pp)
    else:
        # Identity shortcut: no dummy ws_bd DMA, shortcut input aliases x.
        args = (x_dense, w1_bd, dwk_tiled, w3_bd, ge, gte, g3m, gt3m, pp)

    kernel = functools.partial(
        bottleneck_kernel, n=N, h=H, w=W, e=E, cout=Cout,
        stride=stride, pad=pad, shortcut_conv=shortcut_conv)

    # Generation-aware scoped-VMEM budget (64 MiB on v7x vs 128 MiB v5e/v6e).
    try:
        vmem_cap = pltpu.get_tpu_info().vmem_capacity_bytes
    except Exception:
        vmem_cap = 64 * 1024 * 1024
    vmem_limit = int(max(32 << 20, min(vmem_cap * 3 // 4, 100 << 20)))

    vmem = pl.BlockSpec(memory_space=pltpu.MemorySpace.VMEM)
    out2d = pl.pallas_call(
        kernel,
        out_shape=jax.ShapeDtypeStruct((N * Ho, Wo * Cout), f32),
        in_specs=[vmem] * len(args),
        out_specs=vmem,
        scratch_shapes=[pltpu.VMEM((N, Hp, WE), f32)],
        compiler_params=pltpu.CompilerParams(vmem_limit_bytes=vmem_limit),
    )(*args)
    return out2d.reshape(N, Ho, Wo, Cout)


def ref_forward(x, params, *, stride):
    """Pure-JAX reference (NHWC), training-mode BN, relu6, faithful to torch."""
    pad = (stride + 1) // 2
    Cin = x.shape[-1]
    E = params["w1"].shape[1]
    shortcut_conv = (stride != 1) or (Cin != params["w3"].shape[1])
    hi = jax.lax.Precision.HIGHEST

    def bn(y, g, be):
        mean = jnp.mean(y, axis=(0, 1, 2), keepdims=True)
        var = jnp.mean((y - mean) ** 2, axis=(0, 1, 2), keepdims=True)
        return ((y - mean) / jnp.sqrt(var + BN_EPS) * g.reshape(1, 1, 1, -1)
                + be.reshape(1, 1, 1, -1))

    relu6 = lambda v: jnp.clip(v, 0.0, 6.0)

    h = jnp.einsum("nhwc,ce->nhwe", x, params["w1"],
                   precision=hi) + params["b1"].reshape(1, 1, 1, -1)
    h = relu6(bn(h, params["g1"], params["be1"]))

    h2 = jax.lax.conv_general_dilated(
        h, params["dwk"].reshape(3, 3, 1, E),
        window_strides=(stride, stride),
        padding=[(pad, pad), (pad, pad)],
        dimension_numbers=("NHWC", "HWIO", "NHWC"),
        feature_group_count=E, precision=hi) + params["bdw"].reshape(1, 1, 1, -1)
    h2 = relu6(bn(h2, params["g2"], params["be2"]))

    h3 = jnp.einsum("nhwe,ed->nhwd", h2, params["w3"],
                    precision=hi) + params["b3"].reshape(1, 1, 1, -1)
    h3 = bn(h3, params["g3"], params["be3"])

    if shortcut_conv:
        xs = x[:, ::stride, ::stride, :]
        sc = jnp.einsum("nhwc,cd->nhwd", xs, params["ws"],
                        precision=hi) + params["bs"].reshape(1, 1, 1, -1)
        sc = bn(sc, params["gs"], params["bes"])
    else:
        sc = x
    return relu6(h3 + sc)


if __name__ == "__main__":
    N, H, W = 2, 16, 16
    in_c, out_c, t, s = 4, 8, 2, 1          # s=1, in_c != out_c -> conv shortcut
    E = int(in_c * t)

    key = jax.random.PRNGKey(0)
    ks = jax.random.split(key, 17)

    def nrm(k, shape, scale=0.2):
        return (scale * jax.random.normal(k, shape)).astype(jnp.float32)

    params = {
        "w1": nrm(ks[0], (in_c, E)), "b1": nrm(ks[1], (1, E), 0.1),
        "g1": 1.0 + nrm(ks[2], (1, E), 0.1), "be1": nrm(ks[3], (1, E), 0.1),
        "dwk": nrm(ks[4], (3, 3, E)), "bdw": nrm(ks[5], (1, E), 0.1),
        "g2": 1.0 + nrm(ks[6], (1, E), 0.1), "be2": nrm(ks[7], (1, E), 0.1),
        "w3": nrm(ks[8], (E, out_c)), "b3": nrm(ks[9], (1, out_c), 0.1),
        "g3": 1.0 + nrm(ks[10], (1, out_c), 0.1), "be3": nrm(ks[11], (1, out_c), 0.1),
        "ws": nrm(ks[12], (in_c, out_c)), "bs": nrm(ks[13], (1, out_c), 0.1),
        "gs": 1.0 + nrm(ks[14], (1, out_c), 0.1), "bes": nrm(ks[15], (1, out_c), 0.1),
    }

    # PyTorch input layout is NCHW: (2, 4, 16, 16); kernel consumes NHWC.
    x_nchw = nrm(ks[16], (N, in_c, H, W), 1.0)
    x_nhwc = jnp.transpose(x_nchw, (0, 2, 3, 1))

    ref = ref_forward(x_nhwc, params, stride=s)

    # f32 MXU path: strict check against the faithful reference.
    out = jax.block_until_ready(bottleneck_forward(x_nhwc, params, stride=s))
    assert out.shape == ref.shape == (N, H, W, out_c), (out.shape, ref.shape)
    err = float(jnp.max(jnp.abs(out - ref)))
    assert err < 2e-3, f"f32 max abs error {err}"

    # bf16 MXU-operand path (perf-review recommendation for v5e/v6e/v7x MXUs);
    # looser tolerance: bf16 operand rounding propagates through three
    # batch-statistics BatchNorms.
    out_bf = jax.block_until_ready(
        bottleneck_forward(x_nhwc, params, stride=s, mxu_dtype=jnp.bfloat16))
    err_bf = float(jnp.max(jnp.abs(out_bf - ref)))
    assert err_bf < 1e-1, f"bf16 max abs error {err_bf}"

    print("KERNEL_OK")
</pallas_src>

<mosaic_0001>
module attributes {stable_mosaic.version = 11 : i64} {
  func.func @bottleneck_kernel(%arg0: memref<32x64xf32, #tpu.memory_space<vmem>>, %arg1: memref<32x64xf32, #tpu.memory_space<vmem>>, %arg2: memref<64x128xf32, #tpu.memory_space<vmem>>, %arg3: memref<9x128xf32, #tpu.memory_space<vmem>>, %arg4: memref<128x128xf32, #tpu.memory_space<vmem>>, %arg5: memref<64x128xf32, #tpu.memory_space<vmem>>, %arg6: memref<128x16xf32, #tpu.memory_space<vmem>>, %arg7: memref<16x128xf32, #tpu.memory_space<vmem>>, %arg8: memref<128x8xf32, #tpu.memory_space<vmem>>, %arg9: memref<8x128xf32, #tpu.memory_space<vmem>>, %arg10: memref<8x8xf32, #tpu.memory_space<vmem>>, %arg11: memref<32x128xf32, #tpu.memory_space<vmem>>, %arg12: memref<2x18x128xf32, #tpu.memory_space<vmem>>) attributes {dimension_semantics = [], scalar_prefetch = 0 : i64, scratch_operands = 1 : i64, tpu.core_type = #tpu.core_type<tc>} {
    %c0 = arith.constant 0 : index
    %c0_0 = arith.constant 0 : index
    %0 = vector.load %arg10[%c0, %c0_0] : memref<8x8xf32, #tpu.memory_space<vmem>>, vector<8x8xf32>
    %c0_1 = arith.constant 0 : index
    %c0_2 = arith.constant 0 : index
    %1 = vector.load %arg6[%c0_1, %c0_2] : memref<128x16xf32, #tpu.memory_space<vmem>>, vector<128x16xf32>
    %c0_3 = arith.constant 0 : index
    %c0_4 = arith.constant 0 : index
    %2 = vector.load %arg7[%c0_3, %c0_4] : memref<16x128xf32, #tpu.memory_space<vmem>>, vector<16x128xf32>
    %3 = vector.extract_strided_slice %1 {offsets = [0, 0], sizes = [128, 8], strides = [1, 1]} : vector<128x16xf32> to vector<128x8xf32>
    %4 = vector.extract_strided_slice %1 {offsets = [0, 8], sizes = [128, 8], strides = [1, 1]} : vector<128x16xf32> to vector<128x8xf32>
    %5 = vector.extract_strided_slice %2 {offsets = [0, 0], sizes = [8, 128], strides = [1, 1]} : vector<16x128xf32> to vector<8x128xf32>
    %6 = vector.extract_strided_slice %2 {offsets = [8, 0], sizes = [8, 128], strides = [1, 1]} : vector<16x128xf32> to vector<8x128xf32>
    %c0_5 = arith.constant 0 : index
    %c0_6 = arith.constant 0 : index
    %7 = vector.load %arg8[%c0_5, %c0_6] : memref<128x8xf32, #tpu.memory_space<vmem>>, vector<128x8xf32>
    %c0_7 = arith.constant 0 : index
    %c0_8 = arith.constant 0 : index
    %8 = vector.load %arg9[%c0_7, %c0_8] : memref<8x128xf32, #tpu.memory_space<vmem>>, vector<8x128xf32>
    %c0_9 = arith.constant 0 : index
    %c0_10 = arith.constant 0 : index
    %9 = vector.load %arg0[%c0_9, %c0_10] : memref<32x64xf32, #tpu.memory_space<vmem>>, vector<32x64xf32>
    %c0_11 = arith.constant 0 : index
    %c0_12 = arith.constant 0 : index
    %10 = vector.load %arg2[%c0_11, %c0_12] : memref<64x128xf32, #tpu.memory_space<vmem>>, vector<64x128xf32>
    %cst = arith.constant dense<0.000000e+00> : vector<32x128xf32>
    %11 = tpu.matmul %9, %10, %cst {dimension_numbers = #tpu.dot_dimension_numbers<[1], [0], [0], [1], [0, 0, 1, 1], [], []>} : vector<32x64xf32>, vector<64x128xf32>, vector<32x128xf32> -> vector<32x128xf32>
    %12 = vector.extract_strided_slice %0 {offsets = [0, 0], sizes = [1, 8], strides = [1, 1]} : vector<8x8xf32> to vector<1x8xf32>
    %13 = vector.extract_strided_slice %0 {offsets = [1, 0], sizes = [1, 8], strides = [1, 1]} : vector<8x8xf32> to vector<1x8xf32>
    %cst_13 = arith.constant dense<0.000000e+00> : vector<128xf32>
    %14 = vector.multi_reduction <add>, %11, %cst_13 [0] : vector<32x128xf32> to vector<128xf32>
    %15 = vector.shape_cast %14 : vector<128xf32> to vector<1x128xf32>
    %16 = arith.mulf %11, %11 : vector<32x128xf32>
    %cst_14 = arith.constant dense<0.000000e+00> : vector<128xf32>
    %17 = vector.multi_reduction <add>, %16, %cst_14 [0] : vector<32x128xf32> to vector<128xf32>
    %18 = vector.shape_cast %17 : vector<128xf32> to vector<1x128xf32>
    %cst_15 = arith.constant dense<0.000000e+00> : vector<1x8xf32>
    %19 = tpu.matmul %15, %3, %cst_15 {dimension_numbers = #tpu.dot_dimension_numbers<[1], [0], [0], [1], [0, 0, 1, 1], [], []>} : vector<1x128xf32>, vector<128x8xf32>, vector<1x8xf32> -> vector<1x8xf32>
    %cst_16 = arith.constant dense<0.000000e+00> : vector<1x8xf32>
    %20 = tpu.matmul %18, %3, %cst_16 {dimension_numbers = #tpu.dot_dimension_numbers<[1], [0], [0], [1], [0, 0, 1, 1], [], []>} : vector<1x128xf32>, vector<128x8xf32>, vector<1x8xf32> -> vector<1x8xf32>
    %cst_17 = arith.constant 5.120000e+02 : f32
    %21 = vector.broadcast %cst_17 : f32 to vector<1x8xf32>
    %22 = arith.divf %19, %21 : vector<1x8xf32>
    %cst_18 = arith.constant 5.120000e+02 : f32
    %23 = vector.broadcast %cst_18 : f32 to vector<1x8xf32>
    %24 = arith.divf %20, %23 : vector<1x8xf32>
    %25 = arith.mulf %22, %22 : vector<1x8xf32>
    %26 = arith.subf %24, %25 : vector<1x8xf32>
    %cst_19 = arith.constant 0.000000e+00 : f32
    %27 = vector.broadcast %cst_19 : f32 to vector<1x8xf32>
    %28 = arith.maximumf %26, %27 : vector<1x8xf32>
    %cst_20 = arith.constant 9.99999974E-6 : f32
    %29 = vector.broadcast %cst_20 : f32 to vector<1x8xf32>
    %30 = arith.addf %28, %29 : vector<1x8xf32>
    %31 = math.rsqrt %30 : vector<1x8xf32>
    %32 = arith.mulf %12, %31 : vector<1x8xf32>
    %33 = arith.mulf %22, %32 : vector<1x8xf32>
    %34 = arith.subf %13, %33 : vector<1x8xf32>
    %cst_21 = arith.constant dense<0.000000e+00> : vector<1x128xf32>
    %35 = tpu.matmul %32, %5, %cst_21 {dimension_numbers = #tpu.dot_dimension_numbers<[1], [0], [0], [1], [0, 0, 1, 1], [], []>} : vector<1x8xf32>, vector<8x128xf32>, vector<1x128xf32> -> vector<1x128xf32>
    %cst_22 = arith.constant dense<0.000000e+00> : vector<1x128xf32>
    %36 = tpu.matmul %34, %5, %cst_22 {dimension_numbers = #tpu.dot_dimension_numbers<[1], [0], [0], [1], [0, 0, 1, 1], [], []>} : vector<1x8xf32>, vector<8x128xf32>, vector<1x128xf32> -> vector<1x128xf32>
    %37 = vector.broadcast %35 : vector<1x128xf32> to vector<32x128xf32>
    %38 = arith.mulf %11, %37 : vector<32x128xf32>
    %39 = vector.broadcast %36 : vector<1x128xf32> to vector<32x128xf32>
    %40 = arith.addf %38, %39 : vector<32x128xf32>
    %cst_23 = arith.constant 0.000000e+00 : f32
    %cst_24 = arith.constant 6.000000e+00 : f32
    %41 = vector.broadcast %cst_23 : f32 to vector<32x128xf32>
    %42 = arith.maximumf %41, %40 : vector<32x128xf32>
    %43 = vector.broadcast %cst_24 : f32 to vector<32x128xf32>
    %44 = arith.minimumf %43, %42 : vector<32x128xf32>
    %cst_25 = arith.constant 0.000000e+00 : f32
    %45 = vector.broadcast %cst_25 : f32 to vector<2x1x128xf32>
    %c0_26 = arith.constant 0 : index
    %c0_27 = arith.constant 0 : index
    %c0_28 = arith.constant 0 : index
    %46 = vector.load %arg12[%c0_26, %c0_27, %c0_28] : memref<2x18x128xf32, #tpu.memory_space<vmem>>, vector<2x1x128xf32>
    tpu.vector_store %arg12[%c0_26, %c0_27, %c0_28], %45 {strides = array<i32>} : memref<2x18x128xf32, #tpu.memory_space<vmem>>, vector<2x1x128xf32>,
    %cst_29 = arith.constant 0.000000e+00 : f32
    %47 = vector.broadcast %cst_29 : f32 to vector<2x1x128xf32>
    %c0_30 = arith.constant 0 : index
    %c17 = arith.constant 17 : index
    %c0_31 = arith.constant 0 : index
    %48 = vector.load %arg12[%c0_30, %c17, %c0_31] : memref<2x18x128xf32, #tpu.memory_space<vmem>>, vector<2x1x128xf32>
    tpu.vector_store %arg12[%c0_30, %c17, %c0_31], %47 {strides = array<i32>} : memref<2x18x128xf32, #tpu.memory_space<vmem>>, vector<2x1x128xf32>,
    %49 = vector.shape_cast %44 : vector<32x128xf32> to vector<2x16x128xf32>
    %c0_32 = arith.constant 0 : index
    %c1 = arith.constant 1 : index
    %c0_33 = arith.constant 0 : index
    %50 = vector.load %arg12[%c0_32, %c1, %c0_33] : memref<2x18x128xf32, #tpu.memory_space<vmem>>, vector<2x16x128xf32>
    tpu.vector_store %arg12[%c0_32, %c1, %c0_33], %49 {strides = array<i32>} : memref<2x18x128xf32, #tpu.memory_space<vmem>>, vector<2x16x128xf32>,
    %c0_34 = arith.constant 0 : index
    %c0_35 = arith.constant 0 : index
    %c0_36 = arith.constant 0 : index
    %51 = vector.load %arg12[%c0_34, %c0_35, %c0_36] : memref<2x18x128xf32, #tpu.memory_space<vmem>>, vector<2x18x128xf32>
    %cst_37 = arith.constant 0.000000e+00 : f32
    %52 = vector.broadcast %cst_37 : f32 to vector<2x18x128xf32>
    %53 = tpu.concatenate %52, %51, %52 in 2 : vector<2x18x128xf32>, vector<2x18x128xf32>, vector<2x18x128xf32> -> vector<2x18x384xf32>
    %54 = vector.extract_strided_slice %53 {offsets = [0, 0, 120], sizes = [2, 18, 128], strides = [1, 1, 1]} : vector<2x18x384xf32> to vector<2x18x128xf32>
    %55 = vector.extract_strided_slice %53 {offsets = [0, 0, 136], sizes = [2, 18, 128], strides = [1, 1, 1]} : vector<2x18x384xf32> to vector<2x18x128xf32>
    %c0_38 = arith.constant 0 : index
    %c0_39 = arith.constant 0 : index
    %56 = vector.load %arg3[%c0_38, %c0_39] : memref<9x128xf32, #tpu.memory_space<vmem>>, vector<9x128xf32>
    %57 = vector.extract_strided_slice %54 {offsets = [0, 0, 0], sizes = [2, 16, 128], strides = [1, 1, 1]} : vector<2x18x128xf32> to vector<2x16x128xf32>
    %58 = vector.extract_strided_slice %56 {offsets = [0, 0], sizes = [1, 128], strides = [1, 1]} : vector<9x128xf32> to vector<1x128xf32>
    %59 = vector.shape_cast %58 : vector<1x128xf32> to vector<1x1x128xf32>
    %60 = vector.broadcast %59 : vector<1x1x128xf32> to vector<2x16x128xf32>
    %61 = arith.mulf %57, %60 : vector<2x16x128xf32>
    %62 = vector.extract_strided_slice %54 {offsets = [0, 1, 0], sizes = [2, 16, 128], strides = [1, 1, 1]} : vector<2x18x128xf32> to vector<2x16x128xf32>
    %63 = vector.extract_strided_slice %56 {offsets = [3, 0], sizes = [1, 128], strides = [1, 1]} : vector<9x128xf32> to vector<1x128xf32>
    %64 = vector.shape_cast %63 : vector<1x128xf32> to vector<1x1x128xf32>
    %65 = vector.broadcast %64 : vector<1x1x128xf32> to vector<2x16x128xf32>
    %66 = arith.mulf %62, %65 : vector<2x16x128xf32>
    %67 = arith.addf %61, %66 : vector<2x16x128xf32>
    %68 = vector.extract_strided_slice %54 {offsets = [0, 2, 0], sizes = [2, 16, 128], strides = [1, 1, 1]} : vector<2x18x128xf32> to vector<2x16x128xf32>
    %69 = vector.extract_strided_slice %56 {offsets = [6, 0], sizes = [1, 128], strides = [1, 1]} : vector<9x128xf32> to vector<1x128xf32>
    %70 = vector.shape_cast %69 : vector<1x128xf32> to vector<1x1x128xf32>
    %71 = vector.broadcast %70 : vector<1x1x128xf32> to vector<2x16x128xf32>
    %72 = arith.mulf %68, %71 : vector<2x16x128xf32>
    %73 = arith.addf %67, %72 : vector<2x16x128xf32>
    %74 = vector.extract_strided_slice %51 {offsets = [0, 0, 0], sizes = [2, 16, 128], strides = [1, 1, 1]} : vector<2x18x128xf32> to vector<2x16x128xf32>
    %75 = vector.extract_strided_slice %56 {offsets = [1, 0], sizes = [1, 128], strides = [1, 1]} : vector<9x128xf32> to vector<1x128xf32>
    %76 = vector.shape_cast %75 : vector<1x128xf32> to vector<1x1x128xf32>
    %77 = vector.broadcast %76 : vector<1x1x128xf32> to vector<2x16x128xf32>
    %78 = arith.mulf %74, %77 : vector<2x16x128xf32>
    %79 = arith.addf %73, %78 : vector<2x16x128xf32>
    %80 = vector.extract_strided_slice %51 {offsets = [0, 1, 0], sizes = [2, 16, 128], strides = [1, 1, 1]} : vector<2x18x128xf32> to vector<2x16x128xf32>
    %81 = vector.extract_strided_slice %56 {offsets = [4, 0], sizes = [1, 128], strides = [1, 1]} : vector<9x128xf32> to vector<1x128xf32>
    %82 = vector.shape_cast %81 : vector<1x128xf32> to vector<1x1x128xf32>
    %83 = vector.broadcast %82 : vector<1x1x128xf32> to vector<2x16x128xf32>
    %84 = arith.mulf %80, %83 : vector<2x16x128xf32>
    %85 = arith.addf %79, %84 : vector<2x16x128xf32>
    %86 = vector.extract_strided_slice %51 {offsets = [0, 2, 0], sizes = [2, 16, 128], strides = [1, 1, 1]} : vector<2x18x128xf32> to vector<2x16x128xf32>
    %87 = vector.extract_strided_slice %56 {offsets = [7, 0], sizes = [1, 128], strides = [1, 1]} : vector<9x128xf32> to vector<1x128xf32>
    %88 = vector.shape_cast %87 : vector<1x128xf32> to vector<1x1x128xf32>
    %89 = vector.broadcast %88 : vector<1x1x128xf32> to vector<2x16x128xf32>
    %90 = arith.mulf %86, %89 : vector<2x16x128xf32>
    %91 = arith.addf %85, %90 : vector<2x16x128xf32>
    %92 = vector.extract_strided_slice %55 {offsets = [0, 0, 0], sizes = [2, 16, 128], strides = [1, 1, 1]} : vector<2x18x128xf32> to vector<2x16x128xf32>
    %93 = vector.extract_strided_slice %56 {offsets = [2, 0], sizes = [1, 128], strides = [1, 1]} : vector<9x128xf32> to vector<1x128xf32>
    %94 = vector.shape_cast %93 : vector<1x128xf32> to vector<1x1x128xf32>
    %95 = vector.broadcast %94 : vector<1x1x128xf32> to vector<2x16x128xf32>
    %96 = arith.mulf %92, %95 : vector<2x16x128xf32>
    %97 = arith.addf %91, %96 : vector<2x16x128xf32>
    %98 = vector.extract_strided_slice %55 {offsets = [0, 1, 0], sizes = [2, 16, 128], strides = [1, 1, 1]} : vector<2x18x128xf32> to vector<2x16x128xf32>
    %99 = vector.extract_strided_slice %56 {offsets = [5, 0], sizes = [1, 128], strides = [1, 1]} : vector<9x128xf32> to vector<1x128xf32>
    %100 = vector.shape_cast %99 : vector<1x128xf32> to vector<1x1x128xf32>
    %101 = vector.broadcast %100 : vector<1x1x128xf32> to vector<2x16x128xf32>
    %102 = arith.mulf %98, %101 : vector<2x16x128xf32>
    %103 = arith.addf %97, %102 : vector<2x16x128xf32>
    %104 = vector.extract_strided_slice %55 {offsets = [0, 2, 0], sizes = [2, 16, 128], strides = [1, 1, 1]} : vector<2x18x128xf32> to vector<2x16x128xf32>
    %105 = vector.extract_strided_slice %56 {offsets = [8, 0], sizes = [1, 128], strides = [1, 1]} : vector<9x128xf32> to vector<1x128xf32>
    %106 = vector.shape_cast %105 : vector<1x128xf32> to vector<1x1x128xf32>
    %107 = vector.broadcast %106 : vector<1x1x128xf32> to vector<2x16x128xf32>
    %108 = arith.mulf %104, %107 : vector<2x16x128xf32>
    %109 = arith.addf %103, %108 : vector<2x16x128xf32>
    %110 = vector.shape_cast %109 : vector<2x16x128xf32> to vector<32x128xf32>
    %111 = vector.extract_strided_slice %0 {offsets = [2, 0], sizes = [1, 8], strides = [1, 1]} : vector<8x8xf32> to vector<1x8xf32>
    %112 = vector.extract_strided_slice %0 {offsets = [3, 0], sizes = [1, 8], strides = [1, 1]} : vector<8x8xf32> to vector<1x8xf32>
    %cst_40 = arith.constant dense<0.000000e+00> : vector<128xf32>
    %113 = vector.multi_reduction <add>, %110, %cst_40 [0] : vector<32x128xf32> to vector<128xf32>
    %114 = vector.shape_cast %113 : vector<128xf32> to vector<1x128xf32>
    %115 = arith.mulf %110, %110 : vector<32x128xf32>
    %cst_41 = arith.constant dense<0.000000e+00> : vector<128xf32>
    %116 = vector.multi_reduction <add>, %115, %cst_41 [0] : vector<32x128xf32> to vector<128xf32>
    %117 = vector.shape_cast %116 : vector<128xf32> to vector<1x128xf32>
    %cst_42 = arith.constant dense<0.000000e+00> : vector<1x8xf32>
    %118 = tpu.matmul %114, %4, %cst_42 {dimension_numbers = #tpu.dot_dimension_numbers<[1], [0], [0], [1], [0, 0, 1, 1], [], []>} : vector<1x128xf32>, vector<128x8xf32>, vector<1x8xf32> -> vector<1x8xf32>
    %cst_43 = arith.constant dense<0.000000e+00> : vector<1x8xf32>
    %119 = tpu.matmul %117, %4, %cst_43 {dimension_numbers = #tpu.dot_dimension_numbers<[1], [0], [0], [1], [0, 0, 1, 1], [], []>} : vector<1x128xf32>, vector<128x8xf32>, vector<1x8xf32> -> vector<1x8xf32>
    %cst_44 = arith.constant 5.120000e+02 : f32
    %120 = vector.broadcast %cst_44 : f32 to vector<1x8xf32>
    %121 = arith.divf %118, %120 : vector<1x8xf32>
    %cst_45 = arith.constant 5.120000e+02 : f32
    %122 = vector.broadcast %cst_45 : f32 to vector<1x8xf32>
    %123 = arith.divf %119, %122 : vector<1x8xf32>
    %124 = arith.mulf %121, %121 : vector<1x8xf32>
    %125 = arith.subf %123, %124 : vector<1x8xf32>
    %cst_46 = arith.constant 0.000000e+00 : f32
    %126 = vector.broadcast %cst_46 : f32 to vector<1x8xf32>
    %127 = arith.maximumf %125, %126 : vector<1x8xf32>
    %cst_47 = arith.constant 9.99999974E-6 : f32
    %128 = vector.broadcast %cst_47 : f32 to vector<1x8xf32>
    %129 = arith.addf %127, %128 : vector<1x8xf32>
    %130 = math.rsqrt %129 : vector<1x8xf32>
    %131 = arith.mulf %111, %130 : vector<1x8xf32>
    %132 = arith.mulf %121, %131 : vector<1x8xf32>
    %133 = arith.subf %112, %132 : vector<1x8xf32>
    %cst_48 = arith.constant dense<0.000000e+00> : vector<1x128xf32>
    %134 = tpu.matmul %131, %6, %cst_48 {dimension_numbers = #tpu.dot_dimension_numbers<[1], [0], [0], [1], [0, 0, 1, 1], [], []>} : vector<1x8xf32>, vector<8x128xf32>, vector<1x128xf32> -> vector<1x128xf32>
    %cst_49 = arith.constant dense<0.000000e+00> : vector<1x128xf32>
    %135 = tpu.matmul %133, %6, %cst_49 {dimension_numbers = #tpu.dot_dimension_numbers<[1], [0], [0], [1], [0, 0, 1, 1], [], []>} : vector<1x8xf32>, vector<8x128xf32>, vector<1x128xf32> -> vector<1x128xf32>
    %136 = vector.broadcast %134 : vector<1x128xf32> to vector<32x128xf32>
    %137 = arith.mulf %110, %136 : vector<32x128xf32>
    %138 = vector.broadcast %135 : vector<1x128xf32> to vector<32x128xf32>
    %139 = arith.addf %137, %138 : vector<32x128xf32>
    %cst_50 = arith.constant 0.000000e+00 : f32
    %cst_51 = arith.constant 6.000000e+00 : f32
    %140 = vector.broadcast %cst_50 : f32 to vector<32x128xf32>
    %141 = arith.maximumf %140, %139 : vector<32x128xf32>
    %142 = vector.broadcast %cst_51 : f32 to vector<32x128xf32>
    %143 = arith.minimumf %142, %141 : vector<32x128xf32>
    %c0_52 = arith.constant 0 : index
    %c0_53 = arith.constant 0 : index
    %144 = vector.load %arg4[%c0_52, %c0_53] : memref<128x128xf32, #tpu.memory_space<vmem>>, vector<128x128xf32>
    %cst_54 = arith.constant dense<0.000000e+00> : vector<32x128xf32>
    %145 = tpu.matmul %143, %144, %cst_54 {dimension_numbers = #tpu.dot_dimension_numbers<[1], [0], [0], [1], [0, 0, 1, 1], [], []>} : vector<32x128xf32>, vector<128x128xf32>, vector<32x128xf32> -> vector<32x128xf32>
    %146 = vector.extract_strided_slice %0 {offsets = [4, 0], sizes = [1, 8], strides = [1, 1]} : vector<8x8xf32> to vector<1x8xf32>
    %147 = vector.extract_strided_slice %0 {offsets = [5, 0], sizes = [1, 8], strides = [1, 1]} : vector<8x8xf32> to vector<1x8xf32>
    %cst_55 = arith.constant dense<0.000000e+00> : vector<128xf32>
    %148 = vector.multi_reduction <add>, %145, %cst_55 [0] : vector<32x128xf32> to vector<128xf32>
    %149 = vector.shape_cast %148 : vector<128xf32> to vector<1x128xf32>
    %150 = arith.mulf %145, %145 : vector<32x128xf32>
    %cst_56 = arith.constant dense<0.000000e+00> : vector<128xf32>
    %151 = vector.multi_reduction <add>, %150, %cst_56 [0] : vector<32x128xf32> to vector<128xf32>
    %152 = vector.shape_cast %151 : vector<128xf32> to vector<1x128xf32>
    %cst_57 = arith.constant dense<0.000000e+00> : vector<1x8xf32>
    %153 = tpu.matmul %149, %7, %cst_57 {dimension_numbers = #tpu.dot_dimension_numbers<[1], [0], [0], [1], [0, 0, 1, 1], [], []>} : vector<1x128xf32>, vector<128x8xf32>, vector<1x8xf32> -> vector<1x8xf32>
    %cst_58 = arith.constant dense<0.000000e+00> : vector<1x8xf32>
    %154 = tpu.matmul %152, %7, %cst_58 {dimension_numbers = #tpu.dot_dimension_numbers<[1], [0], [0], [1], [0, 0, 1, 1], [], []>} : vector<1x128xf32>, vector<128x8xf32>, vector<1x8xf32> -> vector<1x8xf32>
    %cst_59 = arith.constant 5.120000e+02 : f32
    %155 = vector.broadcast %cst_59 : f32 to vector<1x8xf32>
    %156 = arith.divf %153, %155 : vector<1x8xf32>
    %cst_60 = arith.constant 5.120000e+02 : f32
    %157 = vector.broadcast %cst_60 : f32 to vector<1x8xf32>
    %158 = arith.divf %154, %157 : vector<1x8xf32>
    %159 = arith.mulf %156, %156 : vector<1x8xf32>
    %160 = arith.subf %158, %159 : vector<1x8xf32>
    %cst_61 = arith.constant 0.000000e+00 : f32
    %161 = vector.broadcast %cst_61 : f32 to vector<1x8xf32>
    %162 = arith.maximumf %160, %161 : vector<1x8xf32>
    %cst_62 = arith.constant 9.99999974E-6 : f32
    %163 = vector.broadcast %cst_62 : f32 to vector<1x8xf32>
    %164 = arith.addf %162, %163 : vector<1x8xf32>
    %165 = math.rsqrt %164 : vector<1x8xf32>
    %166 = arith.mulf %146, %165 : vector<1x8xf32>
    %167 = arith.mulf %156, %166 : vector<1x8xf32>
    %168 = arith.subf %147, %167 : vector<1x8xf32>
    %cst_63 = arith.constant dense<0.000000e+00> : vector<1x128xf32>
    %169 = tpu.matmul %166, %8, %cst_63 {dimension_numbers = #tpu.dot_dimension_numbers<[1], [0], [0], [1], [0, 0, 1, 1], [], []>} : vector<1x8xf32>, vector<8x128xf32>, vector<1x128xf32> -> vector<1x128xf32>
    %cst_64 = arith.constant dense<0.000000e+00> : vector<1x128xf32>
    %170 = tpu.matmul %168, %8, %cst_64 {dimension_numbers = #tpu.dot_dimension_numbers<[1], [0], [0], [1], [0, 0, 1, 1], [], []>} : vector<1x8xf32>, vector<8x128xf32>, vector<1x128xf32> -> vector<1x128xf32>
    %171 = vector.broadcast %169 : vector<1x128xf32> to vector<32x128xf32>
    %172 = arith.mulf %145, %171 : vector<32x128xf32>
    %173 = vector.broadcast %170 : vector<1x128xf32> to vector<32x128xf32>
    %174 = arith.addf %172, %173 : vector<32x128xf32>
    %c0_65 = arith.constant 0 : index
    %c0_66 = arith.constant 0 : index
    %175 = vector.load %arg1[%c0_65, %c0_66] : memref<32x64xf32, #tpu.memory_space<vmem>>, vector<32x64xf32>
    %c0_67 = arith.constant 0 : index
    %c0_68 = arith.constant 0 : index
    %176 = vector.load %arg5[%c0_67, %c0_68] : memref<64x128xf32, #tpu.memory_space<vmem>>, vector<64x128xf32>
    %cst_69 = arith.constant dense<0.000000e+00> : vector<32x128xf32>
    %177 = tpu.matmul %175, %176, %cst_69 {dimension_numbers = #tpu.dot_dimension_numbers<[1], [0], [0], [1], [0, 0, 1, 1], [], []>} : vector<32x64xf32>, vector<64x128xf32>, vector<32x128xf32> -> vector<32x128xf32>
    %178 = vector.extract_strided_slice %0 {offsets = [6, 0], sizes = [1, 8], strides = [1, 1]} : vector<8x8xf32> to vector<1x8xf32>
    %179 = vector.extract_strided_slice %0 {offsets = [7, 0], sizes = [1, 8], strides = [1, 1]} : vector<8x8xf32> to vector<1x8xf32>
    %cst_70 = arith.constant dense<0.000000e+00> : vector<128xf32>
    %180 = vector.multi_reduction <add>, %177, %cst_70 [0] : vector<32x128xf32> to vector<128xf32>
    %181 = vector.shape_cast %180 : vector<128xf32> to vector<1x128xf32>
    %182 = arith.mulf %177, %177 : vector<32x128xf32>
    %cst_71 = arith.constant dense<0.000000e+00> : vector<128xf32>
    %183 = vector.multi_reduction <add>, %182, %cst_71 [0] : vector<32x128xf32> to vector<128xf32>
    %184 = vector.shape_cast %183 : vector<128xf32> to vector<1x128xf32>
    %cst_72 = arith.constant dense<0.000000e+00> : vector<1x8xf32>
    %185 = tpu.matmul %181, %7, %cst_72 {dimension_numbers = #tpu.dot_dimension_numbers<[1], [0], [0], [1], [0, 0, 1, 1], [], []>} : vector<1x128xf32>, vector<128x8xf32>, vector<1x8xf32> -> vector<1x8xf32>
    %cst_73 = arith.constant dense<0.000000e+00> : vector<1x8xf32>
    %186 = tpu.matmul %184, %7, %cst_73 {dimension_numbers = #tpu.dot_dimension_numbers<[1], [0], [0], [1], [0, 0, 1, 1], [], []>} : vector<1x128xf32>, vector<128x8xf32>, vector<1x8xf32> -> vector<1x8xf32>
    %cst_74 = arith.constant 5.120000e+02 : f32
    %187 = vector.broadcast %cst_74 : f32 to vector<1x8xf32>
    %188 = arith.divf %185, %187 : vector<1x8xf32>
    %cst_75 = arith.constant 5.120000e+02 : f32
    %189 = vector.broadcast %cst_75 : f32 to vector<1x8xf32>
    %190 = arith.divf %186, %189 : vector<1x8xf32>
    %191 = arith.mulf %188, %188 : vector<1x8xf32>
    %192 = arith.subf %190, %191 : vector<1x8xf32>
    %cst_76 = arith.constant 0.000000e+00 : f32
    %193 = vector.broadcast %cst_76 : f32 to vector<1x8xf32>
    %194 = arith.maximumf %192, %193 : vector<1x8xf32>
    %cst_77 = arith.constant 9.99999974E-6 : f32
    %195 = vector.broadcast %cst_77 : f32 to vector<1x8xf32>
    %196 = arith.addf %194, %195 : vector<1x8xf32>
    %197 = math.rsqrt %196 : vector<1x8xf32>
    %198 = arith.mulf %178, %197 : vector<1x8xf32>
    %199 = arith.mulf %188, %198 : vector<1x8xf32>
    %200 = arith.subf %179, %199 : vector<1x8xf32>
    %cst_78 = arith.constant dense<0.000000e+00> : vector<1x128xf32>
    %201 = tpu.matmul %198, %8, %cst_78 {dimension_numbers = #tpu.dot_dimension_numbers<[1], [0], [0], [1], [0, 0, 1, 1], [], []>} : vector<1x8xf32>, vector<8x128xf32>, vector<1x128xf32> -> vector<1x128xf32>
    %cst_79 = arith.constant dense<0.000000e+00> : vector<1x128xf32>
    %202 = tpu.matmul %200, %8, %cst_79 {dimension_numbers = #tpu.dot_dimension_numbers<[1], [0], [0], [1], [0, 0, 1, 1], [], []>} : vector<1x8xf32>, vector<8x128xf32>, vector<1x128xf32> -> vector<1x128xf32>
    %203 = vector.broadcast %201 : vector<1x128xf32> to vector<32x128xf32>
    %204 = arith.mulf %177, %203 : vector<32x128xf32>
    %205 = vector.broadcast %202 : vector<1x128xf32> to vector<32x128xf32>
    %206 = arith.addf %204, %205 : vector<32x128xf32>
    %207 = arith.addf %174, %206 : vector<32x128xf32>
    %cst_80 = arith.constant 0.000000e+00 : f32
    %cst_81 = arith.constant 6.000000e+00 : f32
    %208 = vector.broadcast %cst_80 : f32 to vector<32x128xf32>
    %209 = arith.maximumf %208, %207 : vector<32x128xf32>
    %210 = vector.broadcast %cst_81 : f32 to vector<32x128xf32>
    %211 = arith.minimumf %210, %209 : vector<32x128xf32>
    %c0_82 = arith.constant 0 : index
    %c0_83 = arith.constant 0 : index
    %212 = vector.load %arg11[%c0_82, %c0_83] : memref<32x128xf32, #tpu.memory_space<vmem>>, vector<32x128xf32>
    tpu.vector_store %arg11[%c0_82, %c0_83], %211 {strides = array<i32>} : memref<32x128xf32, #tpu.memory_space<vmem>>, vector<32x128xf32>,
    return
  }
}

</mosaic_0001>

<llo_original>
// kernel: tpu_custom_call.1
$region0: #{tpu_custom_call.1}
  #allocation0 [shape = 'u32[]', space=smem, size = 0x4, offset = 0x4, fixed_abs, tag = 'smem constant byte address 0x4 - core index']
  #allocation1 [shape = 'u32[144,128]{1,0:T(1,128)}', space=vmem, size = 0x12000, scoped, tag = 'internal scratch']
  #allocation2 [shape = 'f32[2,18,128]{2,1,0:T(8,128)}', space=vmem, size = 0x6000, scoped, tag = 'scratch operand']
  %s0 = inlined_call_operand.hbm [shape: f32[32,64], index: 0, kind: input, shape index: {}]
  %s1 = inlined_call_operand.hbm [shape: f32[32,64], index: 1, kind: input, shape index: {}]
  %s2 = inlined_call_operand.vmem [shape: f32[64,128], index: 2, kind: input, shape index: {}]
  %s3 = inlined_call_operand.vmem [shape: f32[9,128], index: 3, kind: input, shape index: {}]
  %s4 = inlined_call_operand.vmem [shape: f32[128,128], index: 4, kind: input, shape index: {}]
  %s5 = inlined_call_operand.vmem [shape: f32[64,128], index: 5, kind: input, shape index: {}]
  %s6 = inlined_call_operand.vmem [shape: f32[128,16], index: 6, kind: input, shape index: {}]
  %s7 = inlined_call_operand.hbm [shape: f32[16,128], index: 7, kind: input, shape index: {}]
  %s8 = inlined_call_operand.vmem [shape: f32[128,8], index: 8, kind: input, shape index: {}]
  %s9 = inlined_call_operand.vmem [shape: f32[8,128], index: 9, kind: input, shape index: {}]
  %s10 = inlined_call_operand.vmem [shape: f32[8,8], index: 10, kind: input, shape index: {}]
  %s11 = inlined_call_operand.hbm [shape: f32[32,128], index: 11, kind: output, shape index: {}]
  %s12 = sld [smem:[#allocation0]]
  $region66: #{tpu_custom_call.1} parent=0
    _
  %s14 = ssub.s32 1, %s12
  %s15 = scalar_select 0, %s14, %s12
  $region1: #{tpu_custom_call.1} parent=0
    #allocation3 [shape = 'u8[16384]{0}', space=vmem, size = 0x4000, scoped, tag = 'input window, operand 0, single buffered']
    #allocation4 [shape = 's32[1]{0}', space=sflag, size = 0x4, scoped, tag = 'scoped memory for tpu_custom_call.1']
    #allocation5 [shape = 's32[1]{0}', space=sflag, size = 0x4, scoped, tag = 'scoped memory for tpu_custom_call.1']
    #allocation6 [shape = 'u8[16384]{0}', space=vmem, size = 0x4000, scoped, tag = 'input window, operand 1, single buffered']
    #allocation7 [shape = 's32[1]{0}', space=sflag, size = 0x4, scoped, tag = 'scoped memory for tpu_custom_call.1']
    #allocation8 [shape = 'u8[8192]{0}', space=vmem, size = 0x2000, scoped, tag = 'input window, operand 7, single buffered']
    #allocation9 [shape = 'u8[16384]{0}', space=vmem, size = 0x4000, scoped, tag = 'output window, operand 0, single buffered']
    %16 = vsyncpa [#allocation4], 0
    %17 = vsyncpa [#allocation7], 0
    %18 = vsyncpa [#allocation5], 0
    // Predicated region
    $region2: #{tpu_custom_call.1} parent=1 // pred_check
      _
    $region3: #{tpu_custom_call.1} parent=1 // pred_check_branch
      %20 = sbr.rel (0) target = $region5
    $region4: #{tpu_custom_call.1} parent=1 // pred_region
      %s22 = ssub.s32 512, 512
      %23 = vsyncadd [#allocation4], %s22
      %s24 = sshll.u32 [#allocation3], 4
      %s25 = int_to_ptr.vmem [resolvable:$true] %s24
      %30 = dma.hbm_to_vmem [thread:$0]  %s0, 512, %s25, [#allocation4], 128, 128, 8
    $region5: #{tpu_custom_call.1} parent=1 // pred_fallthru
      _
    // Predicated region
    $region6: #{tpu_custom_call.1} parent=1 // pred_check
      _
    $region7: #{tpu_custom_call.1} parent=1 // pred_check_branch
      %32 = sbr.rel (0) target = $region9
    $region8: #{tpu_custom_call.1} parent=1 // pred_region
      %s34 = ssub.s32 512, 512
      %35 = vsyncadd [#allocation7], %s34
      %s36 = sshll.u32 [#allocation6], 4
      %s37 = int_to_ptr.vmem [resolvable:$true] %s36
      %42 = dma.hbm_to_vmem [thread:$0]  %s1, 512, %s37, [#allocation7], 128, 128, 8
    $region9: #{tpu_custom_call.1} parent=1 // pred_fallthru
      _
    // Predicated region
    $region10: #{tpu_custom_call.1} parent=1 // pred_check
      _
    $region11: #{tpu_custom_call.1} parent=1 // pred_check_branch
      %44 = sbr.rel (0) target = $region13
    $region12: #{tpu_custom_call.1} parent=1 // pred_region
      _
    $region13: #{tpu_custom_call.1} parent=1 // pred_fallthru
      _
    // Predicated region
    $region14: #{tpu_custom_call.1} parent=1 // pred_check
      _
    $region15: #{tpu_custom_call.1} parent=1 // pred_check_branch
      %46 = sbr.rel (0) target = $region17
    $region16: #{tpu_custom_call.1} parent=1 // pred_region
      _
    $region17: #{tpu_custom_call.1} parent=1 // pred_fallthru
      _
    // Predicated region
    $region18: #{tpu_custom_call.1} parent=1 // pred_check
      _
    $region19: #{tpu_custom_call.1} parent=1 // pred_check_branch
      %48 = sbr.rel (0) target = $region21
    $region20: #{tpu_custom_call.1} parent=1 // pred_region
      _
    $region21: #{tpu_custom_call.1} parent=1 // pred_fallthru
      _
    // Predicated region
    $region22: #{tpu_custom_call.1} parent=1 // pred_check
      _
    $region23: #{tpu_custom_call.1} parent=1 // pred_check_branch
      %50 = sbr.rel (0) target = $region25
    $region24: #{tpu_custom_call.1} parent=1 // pred_region
      _
    $region25: #{tpu_custom_call.1} parent=1 // pred_fallthru
      _
    // Predicated region
    $region26: #{tpu_custom_call.1} parent=1 // pred_check
      _
    $region27: #{tpu_custom_call.1} parent=1 // pred_check_branch
      %52 = sbr.rel (0) target = $region29
    $region28: #{tpu_custom_call.1} parent=1 // pred_region
      _
    $region29: #{tpu_custom_call.1} parent=1 // pred_fallthru
      _
    // Predicated region
    $region30: #{tpu_custom_call.1} parent=1 // pred_check
      _
    $region31: #{tpu_custom_call.1} parent=1 // pred_check_branch
      %54 = sbr.rel (0) target = $region33
    $region32: #{tpu_custom_call.1} parent=1 // pred_region
      %s56 = ssub.s32 256, 256
      %57 = vsyncadd [#allocation7], %s56
      %s58 = sshll.u32 [#allocation8], 4
      %s59 = int_to_ptr.vmem [resolvable:$true] %s58
      %64 = dma.hbm_to_vmem [thread:$0]  %s7, 256, %s59, [#allocation7], 128, 128, 8
    $region33: #{tpu_custom_call.1} parent=1 // pred_fallthru
      _
    // Predicated region
    $region34: #{tpu_custom_call.1} parent=1 // pred_check
      _
    $region35: #{tpu_custom_call.1} parent=1 // pred_check_branch
      %66 = sbr.rel (0) target = $region37
    $region36: #{tpu_custom_call.1} parent=1 // pred_region
      _
    $region37: #{tpu_custom_call.1} parent=1 // pred_fallthru
      _
    // Predicated region
    $region38: #{tpu_custom_call.1} parent=1 // pred_check
      _
    $region39: #{tpu_custom_call.1} parent=1 // pred_check_branch
      %68 = sbr.rel (0) target = $region41
    $region40: #{tpu_custom_call.1} parent=1 // pred_region
      _
    $region41: #{tpu_custom_call.1} parent=1 // pred_fallthru
      _
    // Predicated region
    $region42: #{tpu_custom_call.1} parent=1 // pred_check
      _
    $region43: #{tpu_custom_call.1} parent=1 // pred_check_branch
      %70 = sbr.rel (0) target = $region45
    $region44: #{tpu_custom_call.1} parent=1 // pred_region
      _
    $region45: #{tpu_custom_call.1} parent=1 // pred_fallthru
      _
    // Predicated region
    $region46: #{tpu_custom_call.1} parent=1 // pred_check
      _
    $region47: #{tpu_custom_call.1} parent=1 // pred_check_branch
      %72 = sbr.rel (0) target = $region49
    $region48: #{tpu_custom_call.1} parent=1 // pred_region
      %73 = dma.done [#allocation4], 512
    $region49: #{tpu_custom_call.1} parent=1 // pred_fallthru
      _
    // Predicated region
    $region50: #{tpu_custom_call.1} parent=1 // pred_check
      _
    $region51: #{tpu_custom_call.1} parent=1 // pred_check_branch
      %75 = sbr.rel (0) target = $region53
    $region52: #{tpu_custom_call.1} parent=1 // pred_region
      %76 = dma.done [#allocation7], 512
    $region53: #{tpu_custom_call.1} parent=1 // pred_fallthru
      _
    // Predicated region
    $region54: #{tpu_custom_call.1} parent=1 // pred_check
      _
    $region55: #{tpu_custom_call.1} parent=1 // pred_check_branch
      %78 = sbr.rel (0) target = $region57
    $region56: #{tpu_custom_call.1} parent=1 // pred_region
      %79 = dma.done [#allocation7], 256
    $region57: #{tpu_custom_call.1} parent=1 // pred_fallthru
      _
    %v80 = vld [vmem:[%s10] sm:$0xff]
    %v81 = vld [vmem:[%s6] sm:$0xff]
    %v82 = vld [vmem:[%s6 + $0x8] sm:$0xff]
    %v83 = vld [vmem:[%s6 + $0x10] sm:$0xff]
    %v84 = vld [vmem:[%s6 + $0x18] sm:$0xff]
    %v85 = vld [vmem:[%s6 + $0x20] sm:$0xff]
    %v86 = vld [vmem:[%s6 + $0x28] sm:$0xff]
    %v87 = vld [vmem:[%s6 + $0x30] sm:$0xff]
    %v88 = vld [vmem:[%s6 + $0x38] sm:$0xff]
    %v89 = vld [vmem:[%s6 + $0x40] sm:$0xff]
    %v90 = vld [vmem:[%s6 + $0x48] sm:$0xff]
    %v91 = vld [vmem:[%s6 + $0x50] sm:$0xff]
    %v92 = vld [vmem:[%s6 + $0x58] sm:$0xff]
    %v93 = vld [vmem:[%s6 + $0x60] sm:$0xff]
    %v94 = vld [vmem:[%s6 + $0x68] sm:$0xff]
    %v95 = vld [vmem:[%s6 + $0x70] sm:$0xff]
    %v96 = vld [vmem:[%s6 + $0x78] sm:$0xff]
    %v97 = vld [vmem:[#allocation8] sm:$0xff]
    %v98 = vld [vmem:[#allocation8 + $0x8] sm:$0xff]
    %v99 = vld [vmem:[%s8] sm:$0xff]
    %v100 = vld [vmem:[%s8 + $0x8] sm:$0xff]
    %v101 = vld [vmem:[%s8 + $0x10] sm:$0xff]
    %v102 = vld [vmem:[%s8 + $0x18] sm:$0xff]
    %v103 = vld [vmem:[%s8 + $0x20] sm:$0xff]
    %v104 = vld [vmem:[%s8 + $0x28] sm:$0xff]
    %v105 = vld [vmem:[%s8 + $0x30] sm:$0xff]
    %v106 = vld [vmem:[%s8 + $0x38] sm:$0xff]
    %v107 = vld [vmem:[%s8 + $0x40] sm:$0xff]
    %v108 = vld [vmem:[%s8 + $0x48] sm:$0xff]
    %v109 = vld [vmem:[%s8 + $0x50] sm:$0xff]
    %v110 = vld [vmem:[%s8 + $0x58] sm:$0xff]
    %v111 = vld [vmem:[%s8 + $0x60] sm:$0xff]
    %v112 = vld [vmem:[%s8 + $0x68] sm:$0xff]
    %v113 = vld [vmem:[%s8 + $0x70] sm:$0xff]
    %v114 = vld [vmem:[%s8 + $0x78] sm:$0xff]
    %v115 = vld [vmem:[%s9] sm:$0xff]
    %v116 = vld [vmem:[#allocation3] sm:$0xff]
    %v117 = vld [vmem:[#allocation3 + $0x8] sm:$0xff]
    %v118 = vld [vmem:[#allocation3 + $0x10] sm:$0xff]
    %v119 = vld [vmem:[#allocation3 + $0x18] sm:$0xff]
    %v120 = vld [vmem:[%s2] sm:$0xff]
    %v121 = vld [vmem:[%s2 + $0x8] sm:$0xff]
    %v122 = vld [vmem:[%s2 + $0x10] sm:$0xff]
    %v123 = vld [vmem:[%s2 + $0x18] sm:$0xff]
    %v124 = vld [vmem:[%s2 + $0x20] sm:$0xff]
    %v125 = vld [vmem:[%s2 + $0x28] sm:$0xff]
    %v126 = vld [vmem:[%s2 + $0x30] sm:$0xff]
    %v127 = vld [vmem:[%s2 + $0x38] sm:$0xff]
    %vm128 = vcmask 523264
    %v130 = vsel %vm128, %v116, 0
    %v133 = vsel %vm128, %v117, 0
    %v136 = vsel %vm128, %v118, 0
    %v139 = vsel %vm128, %v119, 0
    %141 = vmatprep.subr.mxu0 0.0
    %142 = vmatpush1.msra.mxu0 %v120
    %143 = vmatprep.subr.mxu0 0.0
    %144 = vmatpush1.msra.mxu0 %v121
    %145 = vmatprep.subr.mxu0 0.0
    %146 = vmatpush1.msra.mxu0 %v122
    %147 = vmatprep.subr.mxu0 0.0
    %148 = vmatpush1.msra.mxu0 %v123
    %149 = vmatprep.subr.mxu0 0.0
    %150 = vmatpush1.msra.mxu0 %v124
    %151 = vmatprep.subr.mxu0 0.0
    %152 = vmatpush1.msra.mxu0 %v125
    %153 = vmatprep.subr.mxu0 0.0
    %154 = vmatpush1.msra.mxu0 %v126
    %155 = vmatprep.subr.mxu0 0.0
    %156 = vmatpush1.msra.mxu0 %v127
    %157 = vmatprep.subr.mxu0 0.0
    %158 = vmatpush1.msra.mxu0 0.0
    %159 = vmatprep.subr.mxu0 0.0
    %160 = vmatpush1.msra.mxu0 0.0
    %161 = vmatprep.subr.mxu0 0.0
    %162 = vmatpush1.msra.mxu0 0.0
    %163 = vmatprep.subr.mxu0 0.0
    %164 = vmatpush1.msra.mxu0 0.0
    %165 = vmatprep.subr.mxu0 0.0
    %166 = vmatpush1.msra.mxu0 0.0
    %167 = vmatprep.subr.mxu0 0.0
    %168 = vmatpush1.msra.mxu0 0.0
    %169 = vmatprep.subr.mxu0 0.0
    %170 = vmatpush1.msra.mxu0 0.0
    %171 = vmatprep.subr.mxu0 0.0
    %172 = vmatpush1.msra.mxu0 0.0
    %173 = vmatprep.subr.mxu0 0.0
    %174 = vmatpush1.msra.mxu0 0.0
    %175 = vmatprep.subr.mxu0 0.0
    %176 = vmatpush1.msra.mxu0 0.0
    %177 = vmatprep.subr.mxu0 0.0
    %178 = vmatpush1.msra.mxu0 0.0
    %179 = vmatprep.subr.mxu0 0.0
    %180 = vmatpush1.msra.mxu0 0.0
    %181 = vmatprep.subr.mxu0 0.0
    %182 = vmatpush1.msra.mxu0 0.0
    %183 = vmatprep.subr.mxu0 0.0
    %184 = vmatpush1.msra.mxu0 0.0
    %185 = vmatprep.subr.mxu0 0.0
    %186 = vmatpush1.msra.mxu0 0.0
    %187 = vmatprep.subr.mxu0 0.0
    %188 = vmatpush1.msra.mxu0 0.0
    %189 = vmatprep.subr.mxu0 0.0
    %190 = vmatpush1.msra.mxu0 0.0
    %191 = vmatprep.subr.mxu0 0.0
    %192 = vmatpush1.msra.mxu0 0.0
    %193 = vmatprep.subr.mxu0 0.0
    %194 = vmatpush1.msra.mxu0 0.0
    %195 = vmatprep.subr.mxu0 0.0
    %196 = vmatpush1.msra.mxu0 0.0
    %197 = vmatprep.subr.mxu0 0.0
    %198 = vmatpush1.msra.mxu0 0.0
    %199 = vmatprep.subr.mxu0 0.0
    %200 = vmatpush1.msra.mxu0 0.0
    %201 = vmatprep.subr.mxu0 0.0
    %202 = vmatpush1.msra.mxu0 0.0
    %203 = vmatprep.subr.mxu0 0.0
    %204 = vmatpush1.msra.mxu0 0.0
    %205 = vmatprep.mubr.f32.mxu0 0.0
    %206 = vmatmul.mubr.f32.gmra.mrb[0].mxu0 %v130
    %v207 = vpop.f32.mrb[0].mxu0
    %v208 = vadd.f32 0.0, %v207
    %v209 = vpop.f32.mrb[0].mxu0
    %210 = vmatprep.mubr.f32.mxu0 0.0
    %211 = vmatmul.mubr.f32.gmra.mrb[0].mxu0 %v133
    %v212 = vpop.f32.mrb[0].mxu0
    %v213 = vadd.f32 0.0, %v212
    %v214 = vpop.f32.mrb[0].mxu0
    %215 = vmatprep.mubr.f32.mxu0 0.0
    %216 = vmatmul.mubr.f32.gmra.mrb[0].mxu0 %v136
    %v217 = vpop.f32.mrb[0].mxu0
    %v218 = vadd.f32 0.0, %v217
    %v219 = vpop.f32.mrb[0].mxu0
    %220 = vmatprep.mubr.f32.mxu0 0.0
    %221 = vmatmul.mubr.f32.gmra.mrb[0].mxu0 %v139
    %v222 = vpop.f32.mrb[0].mxu0
    %v223 = vadd.f32 0.0, %v222
    %v224 = vpop.f32.mrb[0].mxu0
    %225 = vdwg.mxu0
    %v226 = vadd.f32 %v208, %v213
    %v227 = vadd.f32 %v226, %v218
    %v228 = vadd.f32 %v227, %v223
    %v229 = vrot.slane %v228, 4
    %v230 = vadd.f32 %v228, %v229
    %v231 = vrot.slane %v230, 2
    %v232 = vadd.f32 %v230, %v231
    %v233 = vrot.slane %v232, 1
    %v234 = vadd.f32 %v232, %v233
    %v235 = vmul.f32 %v208, %v208
    %v236 = vmul.f32 %v213, %v213
    %v237 = vmul.f32 %v218, %v218
    %v238 = vmul.f32 %v223, %v223
    %v239 = vadd.f32 %v235, %v236
    %v240 = vadd.f32 %v239, %v237
    %v241 = vadd.f32 %v240, %v238
    %v242 = vrot.slane %v241, 4
    %v243 = vadd.f32 %v241, %v242
    %v244 = vrot.slane %v243, 2
    %v245 = vadd.f32 %v243, %v244
    %v246 = vrot.slane %v245, 1
    %v247 = vadd.f32 %v245, %v246
    %248 = vmatprep.subr.mxu0 0.0
    %249 = vmatpush1.msra.mxu0 %v81
    %250 = vmatprep.subr.mxu0 0.0
    %251 = vmatpush1.msra.mxu0 %v82
    %252 = vmatprep.subr.mxu0 0.0
    %253 = vmatpush1.msra.mxu0 %v83
    %254 = vmatprep.subr.mxu0 0.0
    %255 = vmatpush1.msra.mxu0 %v84
    %256 = vmatprep.subr.mxu0 0.0
    %257 = vmatpush1.msra.mxu0 %v85
    %258 = vmatprep.subr.mxu0 0.0
    %259 = vmatpush1.msra.mxu0 %v86
    %260 = vmatprep.subr.mxu0 0.0
    %261 = vmatpush1.msra.mxu0 %v87
    %262 = vmatprep.subr.mxu0 0.0
    %263 = vmatpush1.msra.mxu0 %v88
    %264 = vmatprep.subr.mxu0 0.0
    %265 = vmatpush1.msra.mxu0 %v89
    %266 = vmatprep.subr.mxu0 0.0
    %267 = vmatpush1.msra.mxu0 %v90
    %268 = vmatprep.subr.mxu0 0.0
    %269 = vmatpush1.msra.mxu0 %v91
    %270 = vmatprep.subr.mxu0 0.0
    %271 = vmatpush1.msra.mxu0 %v92
    %272 = vmatprep.subr.mxu0 0.0
    %273 = vmatpush1.msra.mxu0 %v93
    %274 = vmatprep.subr.mxu0 0.0
    %275 = vmatpush1.msra.mxu0 %v94
    %276 = vmatprep.subr.mxu0 0.0
    %277 = vmatpush1.msra.mxu0 %v95
    %278 = vmatprep.subr.mxu0 0.0
    %279 = vmatpush1.msra.mxu0 %v96
    %280 = vmatprep.subr.mxu0 0.0
    %281 = vmatpush1.msra.mxu0 0.0
    %282 = vmatprep.subr.mxu0 0.0
    %283 = vmatpush1.msra.mxu0 0.0
    %284 = vmatprep.subr.mxu0 0.0
    %285 = vmatpush1.msra.mxu0 0.0
    %286 = vmatprep.subr.mxu0 0.0
    %287 = vmatpush1.msra.mxu0 0.0
    %288 = vmatprep.subr.mxu0 0.0
    %289 = vmatpush1.msra.mxu0 0.0
    %290 = vmatprep.subr.mxu0 0.0
    %291 = vmatpush1.msra.mxu0 0.0
    %292 = vmatprep.subr.mxu0 0.0
    %293 = vmatpush1.msra.mxu0 0.0
    %294 = vmatprep.subr.mxu0 0.0
    %295 = vmatpush1.msra.mxu0 0.0
    %296 = vmatprep.subr.mxu0 0.0
    %297 = vmatpush1.msra.mxu0 0.0
    %298 = vmatprep.subr.mxu0 0.0
    %299 = vmatpush1.msra.mxu0 0.0
    %300 = vmatprep.subr.mxu0 0.0
    %301 = vmatpush1.msra.mxu0 0.0
    %302 = vmatprep.subr.mxu0 0.0
    %303 = vmatpush1.msra.mxu0 0.0
    %304 = vmatprep.subr.mxu0 0.0
    %305 = vmatpush1.msra.mxu0 0.0
    %306 = vmatprep.subr.mxu0 0.0
    %307 = vmatpush1.msra.mxu0 0.0
    %308 = vmatprep.subr.mxu0 0.0
    %309 = vmatpush1.msra.mxu0 0.0
    %310 = vmatprep.subr.mxu0 0.0
    %311 = vmatpush1.msra.mxu0 0.0
    %312 = vmatprep.mubr.f32.mxu0 0.0
    %313 = vmatmul.mubr.f32.gmra.mrb[0].mxu0 %v234
    %v314 = vpop.f32.mrb[0].mxu0
    %v315 = vadd.f32 0.0, %v314
    %v316 = vpop.f32.mrb[0].mxu0
    %317 = vdwg.mxu0
    %318 = vmatprep.subr.mxu0 0.0
    %319 = vmatpush1.msra.mxu0 %v81
    %320 = vmatprep.subr.mxu0 0.0
    %321 = vmatpush1.msra.mxu0 %v82
    %322 = vmatprep.subr.mxu0 0.0
    %323 = vmatpush1.msra.mxu0 %v83
    %324 = vmatprep.subr.mxu0 0.0
    %325 = vmatpush1.msra.mxu0 %v84
    %326 = vmatprep.subr.mxu0 0.0
    %327 = vmatpush1.msra.mxu0 %v85
    %328 = vmatprep.subr.mxu0 0.0
    %329 = vmatpush1.msra.mxu0 %v86
    %330 = vmatprep.subr.mxu0 0.0
    %331 = vmatpush1.msra.mxu0 %v87
    %332 = vmatprep.subr.mxu0 0.0
    %333 = vmatpush1.msra.mxu0 %v88
    %334 = vmatprep.subr.mxu0 0.0
    %335 = vmatpush1.msra.mxu0 %v89
    %336 = vmatprep.subr.mxu0 0.0
    %337 = vmatpush1.msra.mxu0 %v90
    %338 = vmatprep.subr.mxu0 0.0
    %339 = vmatpush1.msra.mxu0 %v91
    %340 = vmatprep.subr.mxu0 0.0
    %341 = vmatpush1.msra.mxu0 %v92
    %342 = vmatprep.subr.mxu0 0.0
    %343 = vmatpush1.msra.mxu0 %v93
    %344 = vmatprep.subr.mxu0 0.0
    %345 = vmatpush1.msra.mxu0 %v94
    %346 = vmatprep.subr.mxu0 0.0
    %347 = vmatpush1.msra.mxu0 %v95
    %348 = vmatprep.subr.mxu0 0.0
    %349 = vmatpush1.msra.mxu0 %v96
    %350 = vmatprep.subr.mxu0 0.0
    %351 = vmatpush1.msra.mxu0 0.0
    %352 = vmatprep.subr.mxu0 0.0
    %353 = vmatpush1.msra.mxu0 0.0
    %354 = vmatprep.subr.mxu0 0.0
    %355 = vmatpush1.msra.mxu0 0.0
    %356 = vmatprep.subr.mxu0 0.0
    %357 = vmatpush1.msra.mxu0 0.0
    %358 = vmatprep.subr.mxu0 0.0
    %359 = vmatpush1.msra.mxu0 0.0
    %360 = vmatprep.subr.mxu0 0.0
    %361 = vmatpush1.msra.mxu0 0.0
    %362 = vmatprep.subr.mxu0 0.0
    %363 = vmatpush1.msra.mxu0 0.0
    %364 = vmatprep.subr.mxu0 0.0
    %365 = vmatpush1.msra.mxu0 0.0
    %366 = vmatprep.subr.mxu0 0.0
    %367 = vmatpush1.msra.mxu0 0.0
    %368 = vmatprep.subr.mxu0 0.0
    %369 = vmatpush1.msra.mxu0 0.0
    %370 = vmatprep.subr.mxu0 0.0
    %371 = vmatpush1.msra.mxu0 0.0
    %372 = vmatprep.subr.mxu0 0.0
    %373 = vmatpush1.msra.mxu0 0.0
    %374 = vmatprep.subr.mxu0 0.0
    %375 = vmatpush1.msra.mxu0 0.0
    %376 = vmatprep.subr.mxu0 0.0
    %377 = vmatpush1.msra.mxu0 0.0
    %378 = vmatprep.subr.mxu0 0.0
    %379 = vmatpush1.msra.mxu0 0.0
    %380 = vmatprep.subr.mxu0 0.0
    %381 = vmatpush1.msra.mxu0 0.0
    %382 = vmatprep.mubr.f32.mxu0 0.0
    %383 = vmatmul.mubr.f32.gmra.mrb[0].mxu0 %v247
    %v384 = vpop.f32.mrb[0].mxu0
    %v385 = vadd.f32 0.0, %v384
    %v386 = vpop.f32.mrb[0].mxu0
    %387 = vdwg.mxu0
    %v388 = vrcp.pop 512.0
    %v389 = vmul.f32 %v315, %v388
    %v390 = vmul.f32 %v385, %v388
    %v391 = vmul.f32 %v389, %v389
    %v392 = vsub.f32 %v390, %v391
    %v393 = vmax.f32 %v392, 0.0
    %v394 = vadd.f32 %v393, 1e-05
    %v395 = vrsqrt.pop %v394
    %v396 = vmul.f32 %v80, %v395
    %v397 = vmul.f32 %v389, %v396
    %v399 = vrot.slane %v397, 7
    %v401 = vsub.f32 %v80, %v399
    %vm402 = vcmask 64512
    %v404 = vsel %vm402, %v396, 0
    %406 = vmatprep.subr.mxu0 0.0
    %407 = vmatpush1.msra.mxu0 %v97
    %408 = vmatprep.subr.mxu0 0.0
    %409 = vmatpush1.msra.mxu0 0.0
    %410 = vmatprep.subr.mxu0 0.0
    %411 = vmatpush1.msra.mxu0 0.0
    %412 = vmatprep.subr.mxu0 0.0
    %413 = vmatpush1.msra.mxu0 0.0
    %414 = vmatprep.subr.mxu0 0.0
    %415 = vmatpush1.msra.mxu0 0.0
    %416 = vmatprep.subr.mxu0 0.0
    %417 = vmatpush1.msra.mxu0 0.0
    %418 = vmatprep.subr.mxu0 0.0
    %419 = vmatpush1.msra.mxu0 0.0
    %420 = vmatprep.subr.mxu0 0.0
    %421 = vmatpush1.msra.mxu0 0.0
    %422 = vmatprep.subr.mxu0 0.0
    %423 = vmatpush1.msra.mxu0 0.0
    %424 = vmatprep.subr.mxu0 0.0
    %425 = vmatpush1.msra.mxu0 0.0
    %426 = vmatprep.subr.mxu0 0.0
    %427 = vmatpush1.msra.mxu0 0.0
    %428 = vmatprep.subr.mxu0 0.0
    %429 = vmatpush1.msra.mxu0 0.0
    %430 = vmatprep.subr.mxu0 0.0
    %431 = vmatpush1.msra.mxu0 0.0
    %432 = vmatprep.subr.mxu0 0.0
    %433 = vmatpush1.msra.mxu0 0.0
    %434 = vmatprep.subr.mxu0 0.0
    %435 = vmatpush1.msra.mxu0 0.0
    %436 = vmatprep.subr.mxu0 0.0
    %437 = vmatpush1.msra.mxu0 0.0
    %438 = vmatprep.subr.mxu0 0.0
    %439 = vmatpush1.msra.mxu0 0.0
    %440 = vmatprep.subr.mxu0 0.0
    %441 = vmatpush1.msra.mxu0 0.0
    %442 = vmatprep.subr.mxu0 0.0
    %443 = vmatpush1.msra.mxu0 0.0
    %444 = vmatprep.subr.mxu0 0.0
    %445 = vmatpush1.msra.mxu0 0.0
    %446 = vmatprep.subr.mxu0 0.0
    %447 = vmatpush1.msra.mxu0 0.0
    %448 = vmatprep.subr.mxu0 0.0
    %449 = vmatpush1.msra.mxu0 0.0
    %450 = vmatprep.subr.mxu0 0.0
    %451 = vmatpush1.msra.mxu0 0.0
    %452 = vmatprep.subr.mxu0 0.0
    %453 = vmatpush1.msra.mxu0 0.0
    %454 = vmatprep.subr.mxu0 0.0
    %455 = vmatpush1.msra.mxu0 0.0
    %456 = vmatprep.subr.mxu0 0.0
    %457 = vmatpush1.msra.mxu0 0.0
    %458 = vmatprep.subr.mxu0 0.0
    %459 = vmatpush1.msra.mxu0 0.0
    %460 = vmatprep.subr.mxu0 0.0
    %461 = vmatpush1.msra.mxu0 0.0
    %462 = vmatprep.subr.mxu0 0.0
    %463 = vmatpush1.msra.mxu0 0.0
    %464 = vmatprep.subr.mxu0 0.0
    %465 = vmatpush1.msra.mxu0 0.0
    %466 = vmatprep.subr.mxu0 0.0
    %467 = vmatpush1.msra.mxu0 0.0
    %468 = vmatprep.subr.mxu0 0.0
    %469 = vmatpush1.msra.mxu0 0.0
    %470 = vmatprep.mubr.f32.mxu0 0.0
    %471 = vmatmul.mubr.f32.gmra.mrb[0].mxu0 %v404
    %v472 = vpop.f32.mrb[0].mxu0
    %v473 = vadd.f32 0.0, %v472
    %v474 = vpop.f32.mrb[0].mxu0
    %475 = vdwg.mxu0
    %v477 = vrot.slane %v401, 1
    %v478 = vsel %vm402, %v477, 0
    %480 = vmatprep.subr.mxu0 0.0
    %481 = vmatpush1.msra.mxu0 %v97
    %482 = vmatprep.subr.mxu0 0.0
    %483 = vmatpush1.msra.mxu0 0.0
    %484 = vmatprep.subr.mxu0 0.0
    %485 = vmatpush1.msra.mxu0 0.0
    %486 = vmatprep.subr.mxu0 0.0
    %487 = vmatpush1.msra.mxu0 0.0
    %488 = vmatprep.subr.mxu0 0.0
    %489 = vmatpush1.msra.mxu0 0.0
    %490 = vmatprep.subr.mxu0 0.0
    %491 = vmatpush1.msra.mxu0 0.0
    %492 = vmatprep.subr.mxu0 0.0
    %493 = vmatpush1.msra.mxu0 0.0
    %494 = vmatprep.subr.mxu0 0.0
    %495 = vmatpush1.msra.mxu0 0.0
    %496 = vmatprep.subr.mxu0 0.0
    %497 = vmatpush1.msra.mxu0 0.0
    %498 = vmatprep.subr.mxu0 0.0
    %499 = vmatpush1.msra.mxu0 0.0
    %500 = vmatprep.subr.mxu0 0.0
    %501 = vmatpush1.msra.mxu0 0.0
    %502 = vmatprep.subr.mxu0 0.0
    %503 = vmatpush1.msra.mxu0 0.0
    %504 = vmatprep.subr.mxu0 0.0
    %505 = vmatpush1.msra.mxu0 0.0
    %506 = vmatprep.subr.mxu0 0.0
    %507 = vmatpush1.msra.mxu0 0.0
    %508 = vmatprep.subr.mxu0 0.0
    %509 = vmatpush1.msra.mxu0 0.0
    %510 = vmatprep.subr.mxu0 0.0
    %511 = vmatpush1.msra.mxu0 0.0
    %512 = vmatprep.subr.mxu0 0.0
    %513 = vmatpush1.msra.mxu0 0.0
    %514 = vmatprep.subr.mxu0 0.0
    %515 = vmatpush1.msra.mxu0 0.0
    %516 = vmatprep.subr.mxu0 0.0
    %517 = vmatpush1.msra.mxu0 0.0
    %518 = vmatprep.subr.mxu0 0.0
    %519 = vmatpush1.msra.mxu0 0.0
    %520 = vmatprep.subr.mxu0 0.0
    %521 = vmatpush1.msra.mxu0 0.0
    %522 = vmatprep.subr.mxu0 0.0
    %523 = vmatpush1.msra.mxu0 0.0
    %524 = vmatprep.subr.mxu0 0.0
    %525 = vmatpush1.msra.mxu0 0.0
    %526 = vmatprep.subr.mxu0 0.0
    %527 = vmatpush1.msra.mxu0 0.0
    %528 = vmatprep.subr.mxu0 0.0
    %529 = vmatpush1.msra.mxu0 0.0
    %530 = vmatprep.subr.mxu0 0.0
    %531 = vmatpush1.msra.mxu0 0.0
    %532 = vmatprep.subr.mxu0 0.0
    %533 = vmatpush1.msra.mxu0 0.0
    %534 = vmatprep.subr.mxu0 0.0
    %535 = vmatpush1.msra.mxu0 0.0
    %536 = vmatprep.subr.mxu0 0.0
    %537 = vmatpush1.msra.mxu0 0.0
    %538 = vmatprep.subr.mxu0 0.0
    %539 = vmatpush1.msra.mxu0 0.0
    %540 = vmatprep.subr.mxu0 0.0
    %541 = vmatpush1.msra.mxu0 0.0
    %542 = vmatprep.subr.mxu0 0.0
    %543 = vmatpush1.msra.mxu0 0.0
    %544 = vmatprep.mubr.f32.mxu0 0.0
    %545 = vmatmul.mubr.f32.gmra.mrb[0].mxu0 %v478
    %v546 = vpop.f32.mrb[0].mxu0
    %v547 = vadd.f32 0.0, %v546
    %v548 = vpop.f32.mrb[0].mxu0
    %549 = vdwg.mxu0
    %v550 = vlaneseq
    %v551 = vshrl.u32 %v550, 7
    %v552 = vsub.s32 0, %v551
    %v553 = vrot.slane %v473, %v552
    %v554 = vmul.f32 %v208, %v553
    %v555 = vmul.f32 %v213, %v553
    %v556 = vmul.f32 %v218, %v553
    %v557 = vmul.f32 %v223, %v553
    %v558 = vlaneseq
    %v559 = vshrl.u32 %v558, 7
    %v560 = vsub.s32 0, %v559
    %v561 = vrot.slane %v547, %v560
    %v562 = vadd.f32 %v554, %v561
    %v563 = vadd.f32 %v555, %v561
    %v564 = vadd.f32 %v556, %v561
    %v565 = vadd.f32 %v557, %v561
    %v566 = vmax.f32 %v562, 0.0
    %v567 = vmax.f32 %v563, 0.0
    %v568 = vmax.f32 %v564, 0.0
    %v569 = vmax.f32 %v565, 0.0
    %v570 = vmin.f32 %v566, 6.0
    %v571 = vmin.f32 %v567, 6.0
    %v572 = vmin.f32 %v568, 6.0
    %v573 = vmin.f32 %v569, 6.0
    %574 = vst [vmem:[#allocation2] sm:$0x1] 0.0
    %575 = vst [vmem:[#allocation2 + $0x18] sm:$0x1] 0.0
    %576 = vst [vmem:[#allocation2 + $0x11] sm:$0x1] 0.0
    %577 = vst [vmem:[#allocation2 + $0x29] sm:$0x1] 0.0
    %578 = vst [vmem:[#allocation2 + $0x1] sm:$0xff] %v570
    %579 = vst [vmem:[#allocation2 + $0x9] sm:$0xff] %v571
    %580 = vst [vmem:[#allocation2 + $0x19] sm:$0xff] %v572
    %581 = vst [vmem:[#allocation2 + $0x21] sm:$0xff] %v573
    %v582 = vld [vmem:[#allocation2] sm:$0xff]
    %v583 = vld [vmem:[#allocation2 + $0x8] sm:$0xff]
    %v584 = vld [vmem:[#allocation2 + $0x10] sm:$0x3]
    %v585 = vld [vmem:[#allocation2 + $0x18] sm:$0xff]
    %v586 = vld [vmem:[#allocation2 + $0x20] sm:$0xff]
    %v587 = vld [vmem:[#allocation2 + $0x28] sm:$0x3]
    %v588 = vld [vmem:[%s3] sm:$0xff]
    %v589 = vld [vmem:[%s3 + $0x8] sm:$0x1]
    %v590 = vlaneseq
    %v591 = vshrl.u32 %v590, 7
    %v592 = vsub.s32 0, %v591
    %v593 = vrot.slane %v588, %v592
    %595 = vrot.lane.b32.xlu0 %v593, 120
    %v596 = vpop.permute.xlu0 %595
    %v598 = vmul.f32 %v596, 0.0
    %v599 = vmul.f32 %v582, %v596
    %v600 = vmul.f32 %v583, %v596
    %v601 = vmul.f32 %v585, %v596
    %v602 = vmul.f32 %v586, %v596
    %v603 = vlaneseq
    %v604 = vshrl.u32 %v603, 7
    %v605 = vsub.s32 3, %v604
    %v606 = vrot.slane %v588, %v605
    %608 = vrot.lane.b32.xlu0 %v606, 120
    %v609 = vpop.permute.xlu0 %608
    %v611 = vmul.f32 %v609, 0.0
    %v612 = vmul.f32 %v582, %v609
    %v613 = vmul.f32 %v583, %v609
    %v614 = vmul.f32 %v584, %v609
    %v615 = vmul.f32 %v585, %v609
    %v616 = vmul.f32 %v586, %v609
    %v617 = vmul.f32 %v587, %v609
    %vm625 = vcmask 1046528
    %v626 = vrot.slane %v611, 1
    %v627 = vsel %vm625, %v626, %v626
    %v628 = vrot.slane %v612, 1
    %v629 = vrot.slane %v613, 1
    %v630 = vsel %vm625, %v628, %v629
    %v631 = vrot.slane %v614, 1
    %v632 = vsel %vm625, %v629, %v631
    %v633 = vrot.slane %v615, 1
    %v634 = vrot.slane %v616, 1
    %v635 = vsel %vm625, %v633, %v634
    %v636 = vrot.slane %v617, 1
    %v637 = vsel %vm625, %v634, %v636
    %v643 = vadd.f32 %v598, %v627
    %v644 = vadd.f32 %v599, %v630
    %v645 = vadd.f32 %v600, %v632
    %v646 = vadd.f32 %v601, %v635
    %v647 = vadd.f32 %v602, %v637
    %v648 = vlaneseq
    %v649 = vshrl.u32 %v648, 7
    %v650 = vsub.s32 6, %v649
    %v651 = vrot.slane %v588, %v650
    %653 = vrot.lane.b32.xlu0 %v651, 120
    %v654 = vpop.permute.xlu0 %653
    %v656 = vmul.f32 %v654, 0.0
    %v657 = vmul.f32 %v582, %v654
    %v658 = vmul.f32 %v583, %v654
    %v659 = vmul.f32 %v584, %v654
    %v660 = vmul.f32 %v585, %v654
    %v661 = vmul.f32 %v586, %v654
    %v662 = vmul.f32 %v587, %v654
    %vm670 = vcmask 1045504
    %v671 = vrot.slane %v656, 2
    %v672 = vsel %vm670, %v671, %v671
    %v673 = vrot.slane %v657, 2
    %v674 = vrot.slane %v658, 2
    %v675 = vsel %vm670, %v673, %v674
    %v676 = vrot.slane %v659, 2
    %v677 = vsel %vm670, %v674, %v676
    %v678 = vrot.slane %v660, 2
    %v679 = vrot.slane %v661, 2
    %v680 = vsel %vm670, %v678, %v679
    %v681 = vrot.slane %v662, 2
    %v682 = vsel %vm670, %v679, %v681
    %v688 = vadd.f32 %v643, %v672
    %v689 = vadd.f32 %v644, %v675
    %v690 = vadd.f32 %v645, %v677
    %v691 = vadd.f32 %v646, %v680
    %v692 = vadd.f32 %v647, %v682
    %v693 = vlaneseq
    %v694 = vshrl.u32 %v693, 7
    %v695 = vsub.s32 1, %v694
    %v696 = vrot.slane %v588, %v695
    %v697 = vmul.f32 %v582, %v696
    %v698 = vmul.f32 %v583, %v696
    %v699 = vmul.f32 %v585, %v696
    %v700 = vmul.f32 %v586, %v696
    %705 = vrot.lane.b32.xlu0 %v697, 120
    %v706 = vpop.permute.xlu0 %705
    %707 = vrot.lane.b32.xlu0 %v698, 120
    %v708 = vpop.permute.xlu0 %707
    %709 = vrot.lane.b32.xlu0 %v699, 120
    %v710 = vpop.permute.xlu0 %709
    %711 = vrot.lane.b32.xlu0 %v700, 120
    %v712 = vpop.permute.xlu0 %711
    %v717 = vadd.f32 %v688, %v706
    %v718 = vadd.f32 %v689, %v706
    %v719 = vadd.f32 %v688, %v708
    %v720 = vadd.f32 %v690, %v708
    %v721 = vadd.f32 %v688, %v710
    %v722 = vadd.f32 %v691, %v710
    %v723 = vadd.f32 %v688, %v712
    %v724 = vadd.f32 %v692, %v712
    %v725 = vlaneseq
    %v726 = vshrl.u32 %v725, 7
    %v727 = vsub.s32 4, %v726
    %v728 = vrot.slane %v588, %v727
    %v729 = vmul.f32 %v582, %v728
    %v730 = vmul.f32 %v583, %v728
    %v731 = vmul.f32 %v584, %v728
    %v732 = vmul.f32 %v585, %v728
    %v733 = vmul.f32 %v586, %v728
    %v734 = vmul.f32 %v587, %v728
    %v741 = vrot.slane %v729, 1
    %v742 = vrot.slane %v730, 1
    %v743 = vsel %vm625, %v741, %v742
    %v744 = vrot.slane %v731, 1
    %v745 = vsel %vm625, %v742, %v744
    %v746 = vrot.slane %v732, 1
    %v747 = vrot.slane %v733, 1
    %v748 = vsel %vm625, %v746, %v747
    %v749 = vrot.slane %v734, 1
    %v750 = vsel %vm625, %v747, %v749
    %751 = vrot.lane.b32.xlu0 %v743, 120
    %v752 = vpop.permute.xlu0 %751
    %753 = vrot.lane.b32.xlu0 %v745, 120
    %v754 = vpop.permute.xlu0 %753
    %755 = vrot.lane.b32.xlu0 %v748, 120
    %v756 = vpop.permute.xlu0 %755
    %757 = vrot.lane.b32.xlu0 %v750, 120
    %v758 = vpop.permute.xlu0 %757
    %v763 = vadd.f32 %v717, %v752
    %v764 = vadd.f32 %v718, %v752
    %v765 = vadd.f32 %v719, %v754
    %v766 = vadd.f32 %v720, %v754
    %v767 = vadd.f32 %v721, %v756
    %v768 = vadd.f32 %v722, %v756
    %v769 = vadd.f32 %v723, %v758
    %v770 = vadd.f32 %v724, %v758
    %v771 = vlaneseq
    %v772 = vshrl.u32 %v771, 7
    %v773 = vsub.s32 7, %v772
    %v774 = vrot.slane %v588, %v773
    %v775 = vmul.f32 %v582, %v774
    %v776 = vmul.f32 %v583, %v774
    %v777 = vmul.f32 %v584, %v774
    %v778 = vmul.f32 %v585, %v774
    %v779 = vmul.f32 %v586, %v774
    %v780 = vmul.f32 %v587, %v774
    %v787 = vrot.slane %v775, 2
    %v788 = vrot.slane %v776, 2
    %v789 = vsel %vm670, %v787, %v788
    %v790 = vrot.slane %v777, 2
    %v791 = vsel %vm670, %v788, %v790
    %v792 = vrot.slane %v778, 2
    %v793 = vrot.slane %v779, 2
    %v794 = vsel %vm670, %v792, %v793
    %v795 = vrot.slane %v780, 2
    %v796 = vsel %vm670, %v793, %v795
    %797 = vrot.lane.b32.xlu0 %v789, 120
    %v798 = vpop.permute.xlu0 %797
    %799 = vrot.lane.b32.xlu0 %v791, 120
    %v800 = vpop.permute.xlu0 %799
    %801 = vrot.lane.b32.xlu0 %v794, 120
    %v802 = vpop.permute.xlu0 %801
    %803 = vrot.lane.b32.xlu0 %v796, 120
    %v804 = vpop.permute.xlu0 %803
    %v809 = vadd.f32 %v763, %v798
    %v810 = vadd.f32 %v764, %v798
    %v811 = vadd.f32 %v765, %v800
    %v812 = vadd.f32 %v766, %v800
    %v813 = vadd.f32 %v767, %v802
    %v814 = vadd.f32 %v768, %v802
    %v815 = vadd.f32 %v769, %v804
    %v816 = vadd.f32 %v770, %v804
    %v817 = vlaneseq
    %v818 = vshrl.u32 %v817, 7
    %v819 = vsub.s32 2, %v818
    %v820 = vrot.slane %v588, %v819
    %822 = vrot.lane.b32.xlu0 %v820, 8
    %v823 = vpop.permute.xlu0 %822
    %v825 = vmul.f32 %v582, %v823
    %v826 = vmul.f32 %v823, 0.0
    %v827 = vmul.f32 %v583, %v823
    %v828 = vmul.f32 %v585, %v823
    %v829 = vmul.f32 %v586, %v823
    %835 = vrot.lane.b32.xlu0 %v825, 112
    %v836 = vpop.permute.xlu0 %835
    %837 = vrot.lane.b32.xlu0 %v826, 112
    %v838 = vpop.permute.xlu0 %837
    %839 = vrot.lane.b32.xlu0 %v827, 112
    %v840 = vpop.permute.xlu0 %839
    %841 = vrot.lane.b32.xlu0 %v828, 112
    %v842 = vpop.permute.xlu0 %841
    %843 = vrot.lane.b32.xlu0 %v829, 112
    %v844 = vpop.permute.xlu0 %843
    %vm845 = vcmask 916480
    %v846 = vsel %vm845, %v836, %v838
    %v847 = vsel %vm845, %v840, %v838
    %v848 = vsel %vm845, %v842, %v838
    %v849 = vsel %vm845, %v844, %v838
    %v858 = vadd.f32 %v809, %v836
    %v859 = vadd.f32 %v810, %v846
    %v860 = vadd.f32 %v811, %v840
    %v861 = vadd.f32 %v812, %v847
    %v862 = vadd.f32 %v813, %v842
    %v863 = vadd.f32 %v814, %v848
    %v864 = vadd.f32 %v815, %v844
    %v865 = vadd.f32 %v816, %v849
    %v866 = vlaneseq
    %v867 = vshrl.u32 %v866, 7
    %v868 = vsub.s32 5, %v867
    %v869 = vrot.slane %v588, %v868
    %871 = vrot.lane.b32.xlu0 %v869, 8
    %v872 = vpop.permute.xlu0 %871
    %v874 = vmul.f32 %v582, %v872
    %v875 = vmul.f32 %v872, 0.0
    %v876 = vmul.f32 %v583, %v872
    %v877 = vmul.f32 %v584, %v872
    %v878 = vmul.f32 %v585, %v872
    %v879 = vmul.f32 %v586, %v872
    %v880 = vmul.f32 %v587, %v872
    %v888 = vrot.slane %v874, 1
    %v889 = vrot.slane %v876, 1
    %v890 = vsel %vm625, %v888, %v889
    %v891 = vrot.slane %v875, 1
    %v892 = vsel %vm625, %v891, %v891
    %v893 = vrot.slane %v877, 1
    %v894 = vsel %vm625, %v889, %v893
    %v895 = vrot.slane %v878, 1
    %v896 = vrot.slane %v879, 1
    %v897 = vsel %vm625, %v895, %v896
    %v898 = vrot.slane %v880, 1
    %v899 = vsel %vm625, %v896, %v898
    %900 = vrot.lane.b32.xlu0 %v890, 112
    %v901 = vpop.permute.xlu0 %900
    %902 = vrot.lane.b32.xlu0 %v892, 112
    %v903 = vpop.permute.xlu0 %902
    %904 = vrot.lane.b32.xlu0 %v894, 112
    %v905 = vpop.permute.xlu0 %904
    %906 = vrot.lane.b32.xlu0 %v897, 112
    %v907 = vpop.permute.xlu0 %906
    %908 = vrot.lane.b32.xlu0 %v899, 112
    %v909 = vpop.permute.xlu0 %908
    %v910 = vsel %vm845, %v901, %v903
    %v911 = vsel %vm845, %v905, %v903
    %v912 = vsel %vm845, %v907, %v903
    %v913 = vsel %vm845, %v909, %v903
    %v922 = vadd.f32 %v858, %v901
    %v923 = vadd.f32 %v859, %v910
    %v924 = vadd.f32 %v860, %v905
    %v925 = vadd.f32 %v861, %v911
    %v926 = vadd.f32 %v862, %v907
    %v927 = vadd.f32 %v863, %v912
    %v928 = vadd.f32 %v864, %v909
    %v929 = vadd.f32 %v865, %v913
    %v930 = vlaneseq
    %v931 = vshrl.u32 %v930, 7
    %v932 = vsub.s32 0, %v931
    %v933 = vrot.slane %v589, %v932
    %935 = vrot.lane.b32.xlu0 %v933, 8
    %v936 = vpop.permute.xlu0 %935
    %v938 = vmul.f32 %v582, %v936
    %v939 = vmul.f32 %v936, 0.0
    %v940 = vmul.f32 %v583, %v936
    %v941 = vmul.f32 %v584, %v936
    %v942 = vmul.f32 %v585, %v936
    %v943 = vmul.f32 %v586, %v936
    %v944 = vmul.f32 %v587, %v936
    %v952 = vrot.slane %v938, 2
    %v953 = vrot.slane %v940, 2
    %v954 = vsel %vm670, %v952, %v953
    %v955 = vrot.slane %v939, 2
    %v956 = vsel %vm670, %v955, %v955
    %v957 = vrot.slane %v941, 2
    %v958 = vsel %vm670, %v953, %v957
    %v959 = vrot.slane %v942, 2
    %v960 = vrot.slane %v943, 2
    %v961 = vsel %vm670, %v959, %v960
    %v962 = vrot.slane %v944, 2
    %v963 = vsel %vm670, %v960, %v962
    %964 = vrot.lane.b32.xlu0 %v954, 112
    %v965 = vpop.permute.xlu0 %964
    %966 = vrot.lane.b32.xlu0 %v956, 112
    %v967 = vpop.permute.xlu0 %966
    %968 = vrot.lane.b32.xlu0 %v958, 112
    %v969 = vpop.permute.xlu0 %968
    %970 = vrot.lane.b32.xlu0 %v961, 112
    %v971 = vpop.permute.xlu0 %970
    %972 = vrot.lane.b32.xlu0 %v963, 112
    %v973 = vpop.permute.xlu0 %972
    %v974 = vsel %vm845, %v965, %v967
    %v975 = vsel %vm845, %v969, %v967
    %v976 = vsel %vm845, %v971, %v967
    %v977 = vsel %vm845, %v973, %v967
    %v986 = vadd.f32 %v922, %v965
    %v987 = vadd.f32 %v923, %v974
    %v988 = vadd.f32 %v924, %v969
    %v989 = vadd.f32 %v925, %v975
    %v990 = vadd.f32 %v926, %v971
    %v991 = vadd.f32 %v927, %v976
    %v992 = vadd.f32 %v928, %v973
    %v993 = vadd.f32 %v929, %v977
    %vm994 = vcmask 1048512
    %v995 = vsel %vm994, %v986, 0.0
    %v996 = vsel %vm994, %v988, 0.0
    %v997 = vadd.f32 %v995, %v996
    %v998 = vsel %vm994, %v990, 0.0
    %v999 = vadd.f32 %v997, %v998
    %v1000 = vsel %vm994, %v992, 0.0
    %v1001 = vadd.f32 %v999, %v1000
    %v1002 = vrot.slane %v1001, 4
    %v1003 = vadd.f32 %v1001, %v1002
    %v1004 = vrot.slane %v1003, 2
    %v1005 = vadd.f32 %v1003, %v1004
    %v1006 = vrot.slane %v1005, 1
    %v1007 = vadd.f32 %v1005, %v1006
    %vm1008 = vcmask 982016
    %v1009 = vsel %vm1008, %v987, 0.0
    %v1010 = vsel %vm1008, %v989, 0.0
    %v1011 = vadd.f32 %v1009, %v1010
    %v1012 = vsel %vm1008, %v991, 0.0
    %v1013 = vadd.f32 %v1011, %v1012
    %v1014 = vsel %vm1008, %v993, 0.0
    %v1015 = vadd.f32 %v1013, %v1014
    %v1016 = vrot.slane %v1015, 4
    %v1017 = vadd.f32 %v1015, %v1016
    %v1018 = vrot.slane %v1017, 2
    %v1019 = vadd.f32 %v1017, %v1018
    %v1020 = vrot.slane %v1019, 1
    %v1021 = vadd.f32 %v1019, %v1020
    %v1022 = vmul.f32 %v986, %v986
    %v1023 = vmul.f32 %v987, %v987
    %v1024 = vmul.f32 %v988, %v988
    %v1025 = vmul.f32 %v989, %v989
    %v1026 = vmul.f32 %v990, %v990
    %v1027 = vmul.f32 %v991, %v991
    %v1028 = vmul.f32 %v992, %v992
    %v1029 = vmul.f32 %v993, %v993
    %v1030 = vsel %vm994, %v1022, 0.0
    %v1031 = vsel %vm994, %v1024, 0.0
    %v1032 = vadd.f32 %v1030, %v1031
    %v1033 = vsel %vm994, %v1026, 0.0
    %v1034 = vadd.f32 %v1032, %v1033
    %v1035 = vsel %vm994, %v1028, 0.0
    %v1036 = vadd.f32 %v1034, %v1035
    %v1037 = vrot.slane %v1036, 4
    %v1038 = vadd.f32 %v1036, %v1037
    %v1039 = vrot.slane %v1038, 2
    %v1040 = vadd.f32 %v1038, %v1039
    %v1041 = vrot.slane %v1040, 1
    %v1042 = vadd.f32 %v1040, %v1041
    %v1043 = vsel %vm1008, %v1023, 0.0
    %v1044 = vsel %vm1008, %v1025, 0.0
    %v1045 = vadd.f32 %v1043, %v1044
    %v1046 = vsel %vm1008, %v1027, 0.0
    %v1047 = vadd.f32 %v1045, %v1046
    %v1048 = vsel %vm1008, %v1029, 0.0
    %v1049 = vadd.f32 %v1047, %v1048
    %v1050 = vrot.slane %v1049, 4
    %v1051 = vadd.f32 %v1049, %v1050
    %v1052 = vrot.slane %v1051, 2
    %v1053 = vadd.f32 %v1051, %v1052
    %v1054 = vrot.slane %v1053, 1
    %v1055 = vadd.f32 %v1053, %v1054
    %1058 = vrot.lane.b32.xlu0 %v1007, 8
    %v1059 = vpop.permute.xlu0 %1058
    %1060 = vrot.lane.b32.xlu0 %v1021, 8
    %v1061 = vpop.permute.xlu0 %1060
    %v1062 = vsel %vm402, %v1059, %v1061
    %1080 = vrot.lane.b32.xlu0 %v81, 120
    %v1081 = vpop.permute.xlu0 %1080
    %1082 = vrot.lane.b32.xlu0 %v82, 120
    %v1083 = vpop.permute.xlu0 %1082
    %1084 = vrot.lane.b32.xlu0 %v83, 120
    %v1085 = vpop.permute.xlu0 %1084
    %1086 = vrot.lane.b32.xlu0 %v84, 120
    %v1087 = vpop.permute.xlu0 %1086
    %1088 = vrot.lane.b32.xlu0 %v85, 120
    %v1089 = vpop.permute.xlu0 %1088
    %1090 = vrot.lane.b32.xlu0 %v86, 120
    %v1091 = vpop.permute.xlu0 %1090
    %1092 = vrot.lane.b32.xlu0 %v87, 120
    %v1093 = vpop.permute.xlu0 %1092
    %1094 = vrot.lane.b32.xlu0 %v88, 120
    %v1095 = vpop.permute.xlu0 %1094
    %1096 = vrot.lane.b32.xlu0 %v89, 120
    %v1097 = vpop.permute.xlu0 %1096
    %1098 = vrot.lane.b32.xlu0 %v90, 120
    %v1099 = vpop.permute.xlu0 %1098
    %1100 = vrot.lane.b32.xlu0 %v91, 120
    %v1101 = vpop.permute.xlu0 %1100
    %1102 = vrot.lane.b32.xlu0 %v92, 120
    %v1103 = vpop.permute.xlu0 %1102
    %1104 = vrot.lane.b32.xlu0 %v93, 120
    %v1105 = vpop.permute.xlu0 %1104
    %1106 = vrot.lane.b32.xlu0 %v94, 120
    %v1107 = vpop.permute.xlu0 %1106
    %1108 = vrot.lane.b32.xlu0 %v95, 120
    %v1109 = vpop.permute.xlu0 %1108
    %1110 = vrot.lane.b32.xlu0 %v96, 120
    %v1111 = vpop.permute.xlu0 %1110
    %1128 = vmatprep.subr.mxu0 0.0
    %1129 = vmatpush1.msra.mxu0 %v1081
    %1130 = vmatprep.subr.mxu0 0.0
    %1131 = vmatpush1.msra.mxu0 %v1083
    %1132 = vmatprep.subr.mxu0 0.0
    %1133 = vmatpush1.msra.mxu0 %v1085
    %1134 = vmatprep.subr.mxu0 0.0
    %1135 = vmatpush1.msra.mxu0 %v1087
    %1136 = vmatprep.subr.mxu0 0.0
    %1137 = vmatpush1.msra.mxu0 %v1089
    %1138 = vmatprep.subr.mxu0 0.0
    %1139 = vmatpush1.msra.mxu0 %v1091
    %1140 = vmatprep.subr.mxu0 0.0
    %1141 = vmatpush1.msra.mxu0 %v1093
    %1142 = vmatprep.subr.mxu0 0.0
    %1143 = vmatpush1.msra.mxu0 %v1095
    %1144 = vmatprep.subr.mxu0 0.0
    %1145 = vmatpush1.msra.mxu0 %v1097
    %1146 = vmatprep.subr.mxu0 0.0
    %1147 = vmatpush1.msra.mxu0 %v1099
    %1148 = vmatprep.subr.mxu0 0.0
    %1149 = vmatpush1.msra.mxu0 %v1101
    %1150 = vmatprep.subr.mxu0 0.0
    %1151 = vmatpush1.msra.mxu0 %v1103
    %1152 = vmatprep.subr.mxu0 0.0
    %1153 = vmatpush1.msra.mxu0 %v1105
    %1154 = vmatprep.subr.mxu0 0.0
    %1155 = vmatpush1.msra.mxu0 %v1107
    %1156 = vmatprep.subr.mxu0 0.0
    %1157 = vmatpush1.msra.mxu0 %v1109
    %1158 = vmatprep.subr.mxu0 0.0
    %1159 = vmatpush1.msra.mxu0 %v1111
    %1160 = vmatprep.subr.mxu0 0.0
    %1161 = vmatpush1.msra.mxu0 0.0
    %1162 = vmatprep.subr.mxu0 0.0
    %1163 = vmatpush1.msra.mxu0 0.0
    %1164 = vmatprep.subr.mxu0 0.0
    %1165 = vmatpush1.msra.mxu0 0.0
    %1166 = vmatprep.subr.mxu0 0.0
    %1167 = vmatpush1.msra.mxu0 0.0
    %1168 = vmatprep.subr.mxu0 0.0
    %1169 = vmatpush1.msra.mxu0 0.0
    %1170 = vmatprep.subr.mxu0 0.0
    %1171 = vmatpush1.msra.mxu0 0.0
    %1172 = vmatprep.subr.mxu0 0.0
    %1173 = vmatpush1.msra.mxu0 0.0
    %1174 = vmatprep.subr.mxu0 0.0
    %1175 = vmatpush1.msra.mxu0 0.0
    %1176 = vmatprep.subr.mxu0 0.0
    %1177 = vmatpush1.msra.mxu0 0.0
    %1178 = vmatprep.subr.mxu0 0.0
    %1179 = vmatpush1.msra.mxu0 0.0
    %1180 = vmatprep.subr.mxu0 0.0
    %1181 = vmatpush1.msra.mxu0 0.0
    %1182 = vmatprep.subr.mxu0 0.0
    %1183 = vmatpush1.msra.mxu0 0.0
    %1184 = vmatprep.subr.mxu0 0.0
    %1185 = vmatpush1.msra.mxu0 0.0
    %1186 = vmatprep.subr.mxu0 0.0
    %1187 = vmatpush1.msra.mxu0 0.0
    %1188 = vmatprep.subr.mxu0 0.0
    %1189 = vmatpush1.msra.mxu0 0.0
    %1190 = vmatprep.subr.mxu0 0.0
    %1191 = vmatpush1.msra.mxu0 0.0
    %1192 = vmatprep.mubr.f32.mxu0 0.0
    %1193 = vmatmul.mubr.f32.gmra.mrb[0].mxu0 %v1062
    %v1194 = vpop.f32.mrb[0].mxu0
    %v1195 = vadd.f32 0.0, %v1194
    %v1196 = vpop.f32.mrb[0].mxu0
    %1197 = vdwg.mxu0
    %1200 = vrot.lane.b32.xlu0 %v1042, 8
    %v1201 = vpop.permute.xlu0 %1200
    %1202 = vrot.lane.b32.xlu0 %v1055, 8
    %v1203 = vpop.permute.xlu0 %1202
    %v1204 = vsel %vm402, %v1201, %v1203
    %1206 = vmatprep.subr.mxu0 0.0
    %1207 = vmatpush1.msra.mxu0 %v1081
    %1208 = vmatprep.subr.mxu0 0.0
    %1209 = vmatpush1.msra.mxu0 %v1083
    %1210 = vmatprep.subr.mxu0 0.0
    %1211 = vmatpush1.msra.mxu0 %v1085
    %1212 = vmatprep.subr.mxu0 0.0
    %1213 = vmatpush1.msra.mxu0 %v1087
    %1214 = vmatprep.subr.mxu0 0.0
    %1215 = vmatpush1.msra.mxu0 %v1089
    %1216 = vmatprep.subr.mxu0 0.0
    %1217 = vmatpush1.msra.mxu0 %v1091
    %1218 = vmatprep.subr.mxu0 0.0
    %1219 = vmatpush1.msra.mxu0 %v1093
    %1220 = vmatprep.subr.mxu0 0.0
    %1221 = vmatpush1.msra.mxu0 %v1095
    %1222 = vmatprep.subr.mxu0 0.0
    %1223 = vmatpush1.msra.mxu0 %v1097
    %1224 = vmatprep.subr.mxu0 0.0
    %1225 = vmatpush1.msra.mxu0 %v1099
    %1226 = vmatprep.subr.mxu0 0.0
    %1227 = vmatpush1.msra.mxu0 %v1101
    %1228 = vmatprep.subr.mxu0 0.0
    %1229 = vmatpush1.msra.mxu0 %v1103
    %1230 = vmatprep.subr.mxu0 0.0
    %1231 = vmatpush1.msra.mxu0 %v1105
    %1232 = vmatprep.subr.mxu0 0.0
    %1233 = vmatpush1.msra.mxu0 %v1107
    %1234 = vmatprep.subr.mxu0 0.0
    %1235 = vmatpush1.msra.mxu0 %v1109
    %1236 = vmatprep.subr.mxu0 0.0
    %1237 = vmatpush1.msra.mxu0 %v1111
    %1238 = vmatprep.subr.mxu0 0.0
    %1239 = vmatpush1.msra.mxu0 0.0
    %1240 = vmatprep.subr.mxu0 0.0
    %1241 = vmatpush1.msra.mxu0 0.0
    %1242 = vmatprep.subr.mxu0 0.0
    %1243 = vmatpush1.msra.mxu0 0.0
    %1244 = vmatprep.subr.mxu0 0.0
    %1245 = vmatpush1.msra.mxu0 0.0
    %1246 = vmatprep.subr.mxu0 0.0
    %1247 = vmatpush1.msra.mxu0 0.0
    %1248 = vmatprep.subr.mxu0 0.0
    %1249 = vmatpush1.msra.mxu0 0.0
    %1250 = vmatprep.subr.mxu0 0.0
    %1251 = vmatpush1.msra.mxu0 0.0
    %1252 = vmatprep.subr.mxu0 0.0
    %1253 = vmatpush1.msra.mxu0 0.0
    %1254 = vmatprep.subr.mxu0 0.0
    %1255 = vmatpush1.msra.mxu0 0.0
    %1256 = vmatprep.subr.mxu0 0.0
    %1257 = vmatpush1.msra.mxu0 0.0
    %1258 = vmatprep.subr.mxu0 0.0
    %1259 = vmatpush1.msra.mxu0 0.0
    %1260 = vmatprep.subr.mxu0 0.0
    %1261 = vmatpush1.msra.mxu0 0.0
    %1262 = vmatprep.subr.mxu0 0.0
    %1263 = vmatpush1.msra.mxu0 0.0
    %1264 = vmatprep.subr.mxu0 0.0
    %1265 = vmatpush1.msra.mxu0 0.0
    %1266 = vmatprep.subr.mxu0 0.0
    %1267 = vmatpush1.msra.mxu0 0.0
    %1268 = vmatprep.subr.mxu0 0.0
    %1269 = vmatpush1.msra.mxu0 0.0
    %1270 = vmatprep.mubr.f32.mxu0 0.0
    %1271 = vmatmul.mubr.f32.gmra.mrb[0].mxu0 %v1204
    %v1272 = vpop.f32.mrb[0].mxu0
    %v1273 = vadd.f32 0.0, %v1272
    %v1274 = vpop.f32.mrb[0].mxu0
    %1275 = vdwg.mxu0
    %v1276 = vmul.f32 %v1195, %v388
    %v1277 = vmul.f32 %v1273, %v388
    %v1278 = vmul.f32 %v1276, %v1276
    %v1279 = vsub.f32 %v1277, %v1278
    %v1280 = vmax.f32 %v1279, 0.0
    %v1281 = vadd.f32 %v1280, 1e-05
    %v1282 = vrsqrt.pop %v1281
    %v1284 = vrot.slane %v1282, 6
    %v1286 = vmul.f32 %v80, %v1284
    %v1288 = vrot.slane %v1286, 2
    %v1290 = vmul.f32 %v1276, %v1288
    %v1292 = vrot.slane %v1290, 5
    %v1294 = vsub.f32 %v80, %v1292
    %v1295 = vsel %vm402, %v1288, 0
    %1297 = vmatprep.subr.mxu0 0.0
    %1298 = vmatpush1.msra.mxu0 %v98
    %1299 = vmatprep.subr.mxu0 0.0
    %1300 = vmatpush1.msra.mxu0 0.0
    %1301 = vmatprep.subr.mxu0 0.0
    %1302 = vmatpush1.msra.mxu0 0.0
    %1303 = vmatprep.subr.mxu0 0.0
    %1304 = vmatpush1.msra.mxu0 0.0
    %1305 = vmatprep.subr.mxu0 0.0
    %1306 = vmatpush1.msra.mxu0 0.0
    %1307 = vmatprep.subr.mxu0 0.0
    %1308 = vmatpush1.msra.mxu0 0.0
    %1309 = vmatprep.subr.mxu0 0.0
    %1310 = vmatpush1.msra.mxu0 0.0
    %1311 = vmatprep.subr.mxu0 0.0
    %1312 = vmatpush1.msra.mxu0 0.0
    %1313 = vmatprep.subr.mxu0 0.0
    %1314 = vmatpush1.msra.mxu0 0.0
    %1315 = vmatprep.subr.mxu0 0.0
    %1316 = vmatpush1.msra.mxu0 0.0
    %1317 = vmatprep.subr.mxu0 0.0
    %1318 = vmatpush1.msra.mxu0 0.0
    %1319 = vmatprep.subr.mxu0 0.0
    %1320 = vmatpush1.msra.mxu0 0.0
    %1321 = vmatprep.subr.mxu0 0.0
    %1322 = vmatpush1.msra.mxu0 0.0
    %1323 = vmatprep.subr.mxu0 0.0
    %1324 = vmatpush1.msra.mxu0 0.0
    %1325 = vmatprep.subr.mxu0 0.0
    %1326 = vmatpush1.msra.mxu0 0.0
    %1327 = vmatprep.subr.mxu0 0.0
    %1328 = vmatpush1.msra.mxu0 0.0
    %1329 = vmatprep.subr.mxu0 0.0
    %1330 = vmatpush1.msra.mxu0 0.0
    %1331 = vmatprep.subr.mxu0 0.0
    %1332 = vmatpush1.msra.mxu0 0.0
    %1333 = vmatprep.subr.mxu0 0.0
    %1334 = vmatpush1.msra.mxu0 0.0
    %1335 = vmatprep.subr.mxu0 0.0
    %1336 = vmatpush1.msra.mxu0 0.0
    %1337 = vmatprep.subr.mxu0 0.0
    %1338 = vmatpush1.msra.mxu0 0.0
    %1339 = vmatprep.subr.mxu0 0.0
    %1340 = vmatpush1.msra.mxu0 0.0
    %1341 = vmatprep.subr.mxu0 0.0
    %1342 = vmatpush1.msra.mxu0 0.0
    %1343 = vmatprep.subr.mxu0 0.0
    %1344 = vmatpush1.msra.mxu0 0.0
    %1345 = vmatprep.subr.mxu0 0.0
    %1346 = vmatpush1.msra.mxu0 0.0
    %1347 = vmatprep.subr.mxu0 0.0
    %1348 = vmatpush1.msra.mxu0 0.0
    %1349 = vmatprep.subr.mxu0 0.0
    %1350 = vmatpush1.msra.mxu0 0.0
    %1351 = vmatprep.subr.mxu0 0.0
    %1352 = vmatpush1.msra.mxu0 0.0
    %1353 = vmatprep.subr.mxu0 0.0
    %1354 = vmatpush1.msra.mxu0 0.0
    %1355 = vmatprep.subr.mxu0 0.0
    %1356 = vmatpush1.msra.mxu0 0.0
    %1357 = vmatprep.subr.mxu0 0.0
    %1358 = vmatpush1.msra.mxu0 0.0
    %1359 = vmatprep.subr.mxu0 0.0
    %1360 = vmatpush1.msra.mxu0 0.0
    %1361 = vmatprep.mubr.f32.mxu0 0.0
    %1362 = vmatmul.mubr.f32.gmra.mrb[0].mxu0 %v1295
    %v1363 = vpop.f32.mrb[0].mxu0
    %v1364 = vadd.f32 0.0, %v1363
    %v1365 = vpop.f32.mrb[0].mxu0
    %1366 = vdwg.mxu0
    %v1368 = vrot.slane %v1294, 3
    %v1369 = vsel %vm402, %v1368, 0
    %1371 = vmatprep.subr.mxu0 0.0
    %1372 = vmatpush1.msra.mxu0 %v98
    %1373 = vmatprep.subr.mxu0 0.0
    %1374 = vmatpush1.msra.mxu0 0.0
    %1375 = vmatprep.subr.mxu0 0.0
    %1376 = vmatpush1.msra.mxu0 0.0
    %1377 = vmatprep.subr.mxu0 0.0
    %1378 = vmatpush1.msra.mxu0 0.0
    %1379 = vmatprep.subr.mxu0 0.0
    %1380 = vmatpush1.msra.mxu0 0.0
    %1381 = vmatprep.subr.mxu0 0.0
    %1382 = vmatpush1.msra.mxu0 0.0
    %1383 = vmatprep.subr.mxu0 0.0
    %1384 = vmatpush1.msra.mxu0 0.0
    %1385 = vmatprep.subr.mxu0 0.0
    %1386 = vmatpush1.msra.mxu0 0.0
    %1387 = vmatprep.subr.mxu0 0.0
    %1388 = vmatpush1.msra.mxu0 0.0
    %1389 = vmatprep.subr.mxu0 0.0
    %1390 = vmatpush1.msra.mxu0 0.0
    %1391 = vmatprep.subr.mxu0 0.0
    %1392 = vmatpush1.msra.mxu0 0.0
    %1393 = vmatprep.subr.mxu0 0.0
    %1394 = vmatpush1.msra.mxu0 0.0
    %1395 = vmatprep.subr.mxu0 0.0
    %1396 = vmatpush1.msra.mxu0 0.0
    %1397 = vmatprep.subr.mxu0 0.0
    %1398 = vmatpush1.msra.mxu0 0.0
    %1399 = vmatprep.subr.mxu0 0.0
    %1400 = vmatpush1.msra.mxu0 0.0
    %1401 = vmatprep.subr.mxu0 0.0
    %1402 = vmatpush1.msra.mxu0 0.0
    %1403 = vmatprep.subr.mxu0 0.0
    %1404 = vmatpush1.msra.mxu0 0.0
    %1405 = vmatprep.subr.mxu0 0.0
    %1406 = vmatpush1.msra.mxu0 0.0
    %1407 = vmatprep.subr.mxu0 0.0
    %1408 = vmatpush1.msra.mxu0 0.0
    %1409 = vmatprep.subr.mxu0 0.0
    %1410 = vmatpush1.msra.mxu0 0.0
    %1411 = vmatprep.subr.mxu0 0.0
    %1412 = vmatpush1.msra.mxu0 0.0
    %1413 = vmatprep.subr.mxu0 0.0
    %1414 = vmatpush1.msra.mxu0 0.0
    %1415 = vmatprep.subr.mxu0 0.0
    %1416 = vmatpush1.msra.mxu0 0.0
    %1417 = vmatprep.subr.mxu0 0.0
    %1418 = vmatpush1.msra.mxu0 0.0
    %1419 = vmatprep.subr.mxu0 0.0
    %1420 = vmatpush1.msra.mxu0 0.0
    %1421 = vmatprep.subr.mxu0 0.0
    %1422 = vmatpush1.msra.mxu0 0.0
    %1423 = vmatprep.subr.mxu0 0.0
    %1424 = vmatpush1.msra.mxu0 0.0
    %1425 = vmatprep.subr.mxu0 0.0
    %1426 = vmatpush1.msra.mxu0 0.0
    %1427 = vmatprep.subr.mxu0 0.0
    %1428 = vmatpush1.msra.mxu0 0.0
    %1429 = vmatprep.subr.mxu0 0.0
    %1430 = vmatpush1.msra.mxu0 0.0
    %1431 = vmatprep.subr.mxu0 0.0
    %1432 = vmatpush1.msra.mxu0 0.0
    %1433 = vmatprep.subr.mxu0 0.0
    %1434 = vmatpush1.msra.mxu0 0.0
    %1435 = vmatprep.mubr.f32.mxu0 0.0
    %1436 = vmatmul.mubr.f32.gmra.mrb[0].mxu0 %v1369
    %v1437 = vpop.f32.mrb[0].mxu0
    %v1438 = vadd.f32 0.0, %v1437
    %v1439 = vpop.f32.mrb[0].mxu0
    %1440 = vdwg.mxu0
    %v1441 = vlaneseq
    %v1442 = vshrl.u32 %v1441, 7
    %v1443 = vsub.s32 0, %v1442
    %v1444 = vrot.slane %v1364, %v1443
    %1446 = vrot.lane.b32.xlu0 %v1444, 120
    %v1447 = vpop.permute.xlu0 %1446
    %v1449 = vmul.f32 %v986, %v1447
    %v1450 = vmul.f32 %v987, %v1447
    %v1451 = vmul.f32 %v988, %v1447
    %v1452 = vmul.f32 %v989, %v1447
    %v1453 = vmul.f32 %v990, %v1447
    %v1454 = vmul.f32 %v991, %v1447
    %v1455 = vmul.f32 %v992, %v1447
    %v1456 = vmul.f32 %v993, %v1447
    %v1457 = vlaneseq
    %v1458 = vshrl.u32 %v1457, 7
    %v1459 = vsub.s32 0, %v1458
    %v1460 = vrot.slane %v1438, %v1459
    %1462 = vrot.lane.b32.xlu0 %v1460, 120
    %v1463 = vpop.permute.xlu0 %1462
    %v1465 = vadd.f32 %v1449, %v1463
    %v1466 = vadd.f32 %v1450, %v1463
    %v1467 = vadd.f32 %v1451, %v1463
    %v1468 = vadd.f32 %v1452, %v1463
    %v1469 = vadd.f32 %v1453, %v1463
    %v1470 = vadd.f32 %v1454, %v1463
    %v1471 = vadd.f32 %v1455, %v1463
    %v1472 = vadd.f32 %v1456, %v1463
    %v1473 = vmax.f32 %v1465, 0.0
    %v1474 = vmax.f32 %v1466, 0.0
    %v1475 = vmax.f32 %v1467, 0.0
    %v1476 = vmax.f32 %v1468, 0.0
    %v1477 = vmax.f32 %v1469, 0.0
    %v1478 = vmax.f32 %v1470, 0.0
    %v1479 = vmax.f32 %v1471, 0.0
    %v1480 = vmax.f32 %v1472, 0.0
    %v1481 = vmin.f32 %v1473, 6.0
    %v1482 = vmin.f32 %v1474, 6.0
    %v1483 = vmin.f32 %v1475, 6.0
    %v1484 = vmin.f32 %v1476, 6.0
    %v1485 = vmin.f32 %v1477, 6.0
    %v1486 = vmin.f32 %v1478, 6.0
    %v1487 = vmin.f32 %v1479, 6.0
    %v1488 = vmin.f32 %v1480, 6.0
    %v1489 = vld [vmem:[%s4] sm:$0xff]
    %v1490 = vld [vmem:[%s4 + $0x8] sm:$0xff]
    %v1491 = vld [vmem:[%s4 + $0x10] sm:$0xff]
    %v1492 = vld [vmem:[%s4 + $0x18] sm:$0xff]
    %v1493 = vld [vmem:[%s4 + $0x20] sm:$0xff]
    %v1494 = vld [vmem:[%s4 + $0x28] sm:$0xff]
    %v1495 = vld [vmem:[%s4 + $0x30] sm:$0xff]
    %v1496 = vld [vmem:[%s4 + $0x38] sm:$0xff]
    %v1497 = vld [vmem:[%s4 + $0x40] sm:$0xff]
    %v1498 = vld [vmem:[%s4 + $0x48] sm:$0xff]
    %v1499 = vld [vmem:[%s4 + $0x50] sm:$0xff]
    %v1500 = vld [vmem:[%s4 + $0x58] sm:$0xff]
    %v1501 = vld [vmem:[%s4 + $0x60] sm:$0xff]
    %v1502 = vld [vmem:[%s4 + $0x68] sm:$0xff]
    %v1503 = vld [vmem:[%s4 + $0x70] sm:$0xff]
    %v1504 = vld [vmem:[%s4 + $0x78] sm:$0xff]
    %1513 = vrot.lane.b32.xlu0 %v1481, 8
    %v1514 = vpop.permute.xlu0 %1513
    %1515 = vrot.lane.b32.xlu0 %v1482, 8
    %v1516 = vpop.permute.xlu0 %1515
    %1517 = vrot.lane.b32.xlu0 %v1483, 8
    %v1518 = vpop.permute.xlu0 %1517
    %1519 = vrot.lane.b32.xlu0 %v1484, 8
    %v1520 = vpop.permute.xlu0 %1519
    %1521 = vrot.lane.b32.xlu0 %v1485, 8
    %v1522 = vpop.permute.xlu0 %1521
    %1523 = vrot.lane.b32.xlu0 %v1486, 8
    %v1524 = vpop.permute.xlu0 %1523
    %1525 = vrot.lane.b32.xlu0 %v1487, 8
    %v1526 = vpop.permute.xlu0 %1525
    %1527 = vrot.lane.b32.xlu0 %v1488, 8
    %v1528 = vpop.permute.xlu0 %1527
    %v1529 = vsel %vm402, %v1514, %v1516
    %v1530 = vsel %vm402, %v1518, %v1520
    %v1531 = vsel %vm402, %v1522, %v1524
    %v1532 = vsel %vm402, %v1526, %v1528
    %1537 = vmatprep.subr.mxu0 0.0
    %1538 = vmatpush1.msra.mxu0 %v1489
    %1539 = vmatprep.subr.mxu0 0.0
    %1540 = vmatpush1.msra.mxu0 %v1490
    %1541 = vmatprep.subr.mxu0 0.0
    %1542 = vmatpush1.msra.mxu0 %v1491
    %1543 = vmatprep.subr.mxu0 0.0
    %1544 = vmatpush1.msra.mxu0 %v1492
    %1545 = vmatprep.subr.mxu0 0.0
    %1546 = vmatpush1.msra.mxu0 %v1493
    %1547 = vmatprep.subr.mxu0 0.0
    %1548 = vmatpush1.msra.mxu0 %v1494
    %1549 = vmatprep.subr.mxu0 0.0
    %1550 = vmatpush1.msra.mxu0 %v1495
    %1551 = vmatprep.subr.mxu0 0.0
    %1552 = vmatpush1.msra.mxu0 %v1496
    %1553 = vmatprep.subr.mxu0 0.0
    %1554 = vmatpush1.msra.mxu0 %v1497
    %1555 = vmatprep.subr.mxu0 0.0
    %1556 = vmatpush1.msra.mxu0 %v1498
    %1557 = vmatprep.subr.mxu0 0.0
    %1558 = vmatpush1.msra.mxu0 %v1499
    %1559 = vmatprep.subr.mxu0 0.0
    %1560 = vmatpush1.msra.mxu0 %v1500
    %1561 = vmatprep.subr.mxu0 0.0
    %1562 = vmatpush1.msra.mxu0 %v1501
    %1563 = vmatprep.subr.mxu0 0.0
    %1564 = vmatpush1.msra.mxu0 %v1502
    %1565 = vmatprep.subr.mxu0 0.0
    %1566 = vmatpush1.msra.mxu0 %v1503
    %1567 = vmatprep.subr.mxu0 0.0
    %1568 = vmatpush1.msra.mxu0 %v1504
    %1569 = vmatprep.subr.mxu0 0.0
    %1570 = vmatpush1.msra.mxu0 0.0
    %1571 = vmatprep.subr.mxu0 0.0
    %1572 = vmatpush1.msra.mxu0 0.0
    %1573 = vmatprep.subr.mxu0 0.0
    %1574 = vmatpush1.msra.mxu0 0.0
    %1575 = vmatprep.subr.mxu0 0.0
    %1576 = vmatpush1.msra.mxu0 0.0
    %1577 = vmatprep.subr.mxu0 0.0
    %1578 = vmatpush1.msra.mxu0 0.0
    %1579 = vmatprep.subr.mxu0 0.0
    %1580 = vmatpush1.msra.mxu0 0.0
    %1581 = vmatprep.subr.mxu0 0.0
    %1582 = vmatpush1.msra.mxu0 0.0
    %1583 = vmatprep.subr.mxu0 0.0
    %1584 = vmatpush1.msra.mxu0 0.0
    %1585 = vmatprep.subr.mxu0 0.0
    %1586 = vmatpush1.msra.mxu0 0.0
    %1587 = vmatprep.subr.mxu0 0.0
    %1588 = vmatpush1.msra.mxu0 0.0
    %1589 = vmatprep.subr.mxu0 0.0
    %1590 = vmatpush1.msra.mxu0 0.0
    %1591 = vmatprep.subr.mxu0 0.0
    %1592 = vmatpush1.msra.mxu0 0.0
    %1593 = vmatprep.subr.mxu0 0.0
    %1594 = vmatpush1.msra.mxu0 0.0
    %1595 = vmatprep.subr.mxu0 0.0
    %1596 = vmatpush1.msra.mxu0 0.0
    %1597 = vmatprep.subr.mxu0 0.0
    %1598 = vmatpush1.msra.mxu0 0.0
    %1599 = vmatprep.subr.mxu0 0.0
    %1600 = vmatpush1.msra.mxu0 0.0
    %1601 = vmatprep.mubr.f32.mxu0 0.0
    %1602 = vmatmul.mubr.f32.gmra.mrb[0].mxu0 %v1529
    %v1603 = vpop.f32.mrb[0].mxu0
    %v1604 = vadd.f32 0.0, %v1603
    %v1605 = vpop.f32.mrb[0].mxu0
    %1606 = vmatprep.mubr.f32.mxu0 0.0
    %1607 = vmatmul.mubr.f32.gmra.mrb[0].mxu0 %v1530
    %v1608 = vpop.f32.mrb[0].mxu0
    %v1609 = vadd.f32 0.0, %v1608
    %v1610 = vpop.f32.mrb[0].mxu0
    %1611 = vmatprep.mubr.f32.mxu0 0.0
    %1612 = vmatmul.mubr.f32.gmra.mrb[0].mxu0 %v1531
    %v1613 = vpop.f32.mrb[0].mxu0
    %v1614 = vadd.f32 0.0, %v1613
    %v1615 = vpop.f32.mrb[0].mxu0
    %1616 = vmatprep.mubr.f32.mxu0 0.0
    %1617 = vmatmul.mubr.f32.gmra.mrb[0].mxu0 %v1532
    %v1618 = vpop.f32.mrb[0].mxu0
    %v1619 = vadd.f32 0.0, %v1618
    %v1620 = vpop.f32.mrb[0].mxu0
    %1621 = vdwg.mxu0
    %v1622 = vadd.f32 %v1604, %v1609
    %v1623 = vadd.f32 %v1622, %v1614
    %v1624 = vadd.f32 %v1623, %v1619
    %v1625 = vrot.slane %v1624, 4
    %v1626 = vadd.f32 %v1624, %v1625
    %v1627 = vrot.slane %v1626, 2
    %v1628 = vadd.f32 %v1626, %v1627
    %v1629 = vrot.slane %v1628, 1
    %v1630 = vadd.f32 %v1628, %v1629
    %v1631 = vmul.f32 %v1604, %v1604
    %v1632 = vmul.f32 %v1609, %v1609
    %v1633 = vmul.f32 %v1614, %v1614
    %v1634 = vmul.f32 %v1619, %v1619
    %v1635 = vadd.f32 %v1631, %v1632
    %v1636 = vadd.f32 %v1635, %v1633
    %v1637 = vadd.f32 %v1636, %v1634
    %v1638 = vrot.slane %v1637, 4
    %v1639 = vadd.f32 %v1637, %v1638
    %v1640 = vrot.slane %v1639, 2
    %v1641 = vadd.f32 %v1639, %v1640
    %v1642 = vrot.slane %v1641, 1
    %v1643 = vadd.f32 %v1641, %v1642
    %1644 = vmatprep.subr.mxu0 0.0
    %1645 = vmatpush1.msra.mxu0 %v99
    %1646 = vmatprep.subr.mxu0 0.0
    %1647 = vmatpush1.msra.mxu0 %v100
    %1648 = vmatprep.subr.mxu0 0.0
    %1649 = vmatpush1.msra.mxu0 %v101
    %1650 = vmatprep.subr.mxu0 0.0
    %1651 = vmatpush1.msra.mxu0 %v102
    %1652 = vmatprep.subr.mxu0 0.0
    %1653 = vmatpush1.msra.mxu0 %v103
    %1654 = vmatprep.subr.mxu0 0.0
    %1655 = vmatpush1.msra.mxu0 %v104
    %1656 = vmatprep.subr.mxu0 0.0
    %1657 = vmatpush1.msra.mxu0 %v105
    %1658 = vmatprep.subr.mxu0 0.0
    %1659 = vmatpush1.msra.mxu0 %v106
    %1660 = vmatprep.subr.mxu0 0.0
    %1661 = vmatpush1.msra.mxu0 %v107
    %1662 = vmatprep.subr.mxu0 0.0
    %1663 = vmatpush1.msra.mxu0 %v108
    %1664 = vmatprep.subr.mxu0 0.0
    %1665 = vmatpush1.msra.mxu0 %v109
    %1666 = vmatprep.subr.mxu0 0.0
    %1667 = vmatpush1.msra.mxu0 %v110
    %1668 = vmatprep.subr.mxu0 0.0
    %1669 = vmatpush1.msra.mxu0 %v111
    %1670 = vmatprep.subr.mxu0 0.0
    %1671 = vmatpush1.msra.mxu0 %v112
    %1672 = vmatprep.subr.mxu0 0.0
    %1673 = vmatpush1.msra.mxu0 %v113
    %1674 = vmatprep.subr.mxu0 0.0
    %1675 = vmatpush1.msra.mxu0 %v114
    %1676 = vmatprep.subr.mxu0 0.0
    %1677 = vmatpush1.msra.mxu0 0.0
    %1678 = vmatprep.subr.mxu0 0.0
    %1679 = vmatpush1.msra.mxu0 0.0
    %1680 = vmatprep.subr.mxu0 0.0
    %1681 = vmatpush1.msra.mxu0 0.0
    %1682 = vmatprep.subr.mxu0 0.0
    %1683 = vmatpush1.msra.mxu0 0.0
    %1684 = vmatprep.subr.mxu0 0.0
    %1685 = vmatpush1.msra.mxu0 0.0
    %1686 = vmatprep.subr.mxu0 0.0
    %1687 = vmatpush1.msra.mxu0 0.0
    %1688 = vmatprep.subr.mxu0 0.0
    %1689 = vmatpush1.msra.mxu0 0.0
    %1690 = vmatprep.subr.mxu0 0.0
    %1691 = vmatpush1.msra.mxu0 0.0
    %1692 = vmatprep.subr.mxu0 0.0
    %1693 = vmatpush1.msra.mxu0 0.0
    %1694 = vmatprep.subr.mxu0 0.0
    %1695 = vmatpush1.msra.mxu0 0.0
    %1696 = vmatprep.subr.mxu0 0.0
    %1697 = vmatpush1.msra.mxu0 0.0
    %1698 = vmatprep.subr.mxu0 0.0
    %1699 = vmatpush1.msra.mxu0 0.0
    %1700 = vmatprep.subr.mxu0 0.0
    %1701 = vmatpush1.msra.mxu0 0.0
    %1702 = vmatprep.subr.mxu0 0.0
    %1703 = vmatpush1.msra.mxu0 0.0
    %1704 = vmatprep.subr.mxu0 0.0
    %1705 = vmatpush1.msra.mxu0 0.0
    %1706 = vmatprep.subr.mxu0 0.0
    %1707 = vmatpush1.msra.mxu0 0.0
    %1708 = vmatprep.mubr.f32.mxu0 0.0
    %1709 = vmatmul.mubr.f32.gmra.mrb[0].mxu0 %v1630
    %v1710 = vpop.f32.mrb[0].mxu0
    %v1711 = vadd.f32 0.0, %v1710
    %v1712 = vpop.f32.mrb[0].mxu0
    %1713 = vdwg.mxu0
    %1714 = vmatprep.subr.mxu0 0.0
    %1715 = vmatpush1.msra.mxu0 %v99
    %1716 = vmatprep.subr.mxu0 0.0
    %1717 = vmatpush1.msra.mxu0 %v100
    %1718 = vmatprep.subr.mxu0 0.0
    %1719 = vmatpush1.msra.mxu0 %v101
    %1720 = vmatprep.subr.mxu0 0.0
    %1721 = vmatpush1.msra.mxu0 %v102
    %1722 = vmatprep.subr.mxu0 0.0
    %1723 = vmatpush1.msra.mxu0 %v103
    %1724 = vmatprep.subr.mxu0 0.0
    %1725 = vmatpush1.msra.mxu0 %v104
    %1726 = vmatprep.subr.mxu0 0.0
    %1727 = vmatpush1.msra.mxu0 %v105
    %1728 = vmatprep.subr.mxu0 0.0
    %1729 = vmatpush1.msra.mxu0 %v106
    %1730 = vmatprep.subr.mxu0 0.0
    %1731 = vmatpush1.msra.mxu0 %v107
    %1732 = vmatprep.subr.mxu0 0.0
    %1733 = vmatpush1.msra.mxu0 %v108
    %1734 = vmatprep.subr.mxu0 0.0
    %1735 = vmatpush1.msra.mxu0 %v109
    %1736 = vmatprep.subr.mxu0 0.0
    %1737 = vmatpush1.msra.mxu0 %v110
    %1738 = vmatprep.subr.mxu0 0.0
    %1739 = vmatpush1.msra.mxu0 %v111
    %1740 = vmatprep.subr.mxu0 0.0
    %1741 = vmatpush1.msra.mxu0 %v112
    %1742 = vmatprep.subr.mxu0 0.0
    %1743 = vmatpush1.msra.mxu0 %v113
    %1744 = vmatprep.subr.mxu0 0.0
    %1745 = vmatpush1.msra.mxu0 %v114
    %1746 = vmatprep.subr.mxu0 0.0
    %1747 = vmatpush1.msra.mxu0 0.0
    %1748 = vmatprep.subr.mxu0 0.0
    %1749 = vmatpush1.msra.mxu0 0.0
    %1750 = vmatprep.subr.mxu0 0.0
    %1751 = vmatpush1.msra.mxu0 0.0
    %1752 = vmatprep.subr.mxu0 0.0
    %1753 = vmatpush1.msra.mxu0 0.0
    %1754 = vmatprep.subr.mxu0 0.0
    %1755 = vmatpush1.msra.mxu0 0.0
    %1756 = vmatprep.subr.mxu0 0.0
    %1757 = vmatpush1.msra.mxu0 0.0
    %1758 = vmatprep.subr.mxu0 0.0
    %1759 = vmatpush1.msra.mxu0 0.0
    %1760 = vmatprep.subr.mxu0 0.0
    %1761 = vmatpush1.msra.mxu0 0.0
    %1762 = vmatprep.subr.mxu0 0.0
    %1763 = vmatpush1.msra.mxu0 0.0
    %1764 = vmatprep.subr.mxu0 0.0
    %1765 = vmatpush1.msra.mxu0 0.0
    %1766 = vmatprep.subr.mxu0 0.0
    %1767 = vmatpush1.msra.mxu0 0.0
    %1768 = vmatprep.subr.mxu0 0.0
    %1769 = vmatpush1.msra.mxu0 0.0
    %1770 = vmatprep.subr.mxu0 0.0
    %1771 = vmatpush1.msra.mxu0 0.0
    %1772 = vmatprep.subr.mxu0 0.0
    %1773 = vmatpush1.msra.mxu0 0.0
    %1774 = vmatprep.subr.mxu0 0.0
    %1775 = vmatpush1.msra.mxu0 0.0
    %1776 = vmatprep.subr.mxu0 0.0
    %1777 = vmatpush1.msra.mxu0 0.0
    %1778 = vmatprep.mubr.f32.mxu0 0.0
    %1779 = vmatmul.mubr.f32.gmra.mrb[0].mxu0 %v1643
    %v1780 = vpop.f32.mrb[0].mxu0
    %v1781 = vadd.f32 0.0, %v1780
    %v1782 = vpop.f32.mrb[0].mxu0
    %1783 = vdwg.mxu0
    %v1784 = vmul.f32 %v1711, %v388
    %v1785 = vmul.f32 %v1781, %v388
    %v1786 = vmul.f32 %v1784, %v1784
    %v1787 = vsub.f32 %v1785, %v1786
    %v1788 = vmax.f32 %v1787, 0.0
    %v1789 = vadd.f32 %v1788, 1e-05
    %v1790 = vrsqrt.pop %v1789
    %v1792 = vrot.slane %v1790, 4
    %v1794 = vmul.f32 %v80, %v1792
    %v1796 = vrot.slane %v1794, 4
    %v1798 = vmul.f32 %v1784, %v1796
    %v1800 = vrot.slane %v1798, 3
    %v1802 = vsub.f32 %v80, %v1800
    %v1803 = vsel %vm402, %v1796, 0
    %1805 = vmatprep.subr.mxu0 0.0
    %1806 = vmatpush1.msra.mxu0 %v115
    %1807 = vmatprep.subr.mxu0 0.0
    %1808 = vmatpush1.msra.mxu0 0.0
    %1809 = vmatprep.subr.mxu0 0.0
    %1810 = vmatpush1.msra.mxu0 0.0
    %1811 = vmatprep.subr.mxu0 0.0
    %1812 = vmatpush1.msra.mxu0 0.0
    %1813 = vmatprep.subr.mxu0 0.0
    %1814 = vmatpush1.msra.mxu0 0.0
    %1815 = vmatprep.subr.mxu0 0.0
    %1816 = vmatpush1.msra.mxu0 0.0
    %1817 = vmatprep.subr.mxu0 0.0
    %1818 = vmatpush1.msra.mxu0 0.0
    %1819 = vmatprep.subr.mxu0 0.0
    %1820 = vmatpush1.msra.mxu0 0.0
    %1821 = vmatprep.subr.mxu0 0.0
    %1822 = vmatpush1.msra.mxu0 0.0
    %1823 = vmatprep.subr.mxu0 0.0
    %1824 = vmatpush1.msra.mxu0 0.0
    %1825 = vmatprep.subr.mxu0 0.0
    %1826 = vmatpush1.msra.mxu0 0.0
    %1827 = vmatprep.subr.mxu0 0.0
    %1828 = vmatpush1.msra.mxu0 0.0
    %1829 = vmatprep.subr.mxu0 0.0
    %1830 = vmatpush1.msra.mxu0 0.0
    %1831 = vmatprep.subr.mxu0 0.0
    %1832 = vmatpush1.msra.mxu0 0.0
    %1833 = vmatprep.subr.mxu0 0.0
    %1834 = vmatpush1.msra.mxu0 0.0
    %1835 = vmatprep.subr.mxu0 0.0
    %1836 = vmatpush1.msra.mxu0 0.0
    %1837 = vmatprep.subr.mxu0 0.0
    %1838 = vmatpush1.msra.mxu0 0.0
    %1839 = vmatprep.subr.mxu0 0.0
    %1840 = vmatpush1.msra.mxu0 0.0
    %1841 = vmatprep.subr.mxu0 0.0
    %1842 = vmatpush1.msra.mxu0 0.0
    %1843 = vmatprep.subr.mxu0 0.0
    %1844 = vmatpush1.msra.mxu0 0.0
    %1845 = vmatprep.subr.mxu0 0.0
    %1846 = vmatpush1.msra.mxu0 0.0
    %1847 = vmatprep.subr.mxu0 0.0
    %1848 = vmatpush1.msra.mxu0 0.0
    %1849 = vmatprep.subr.mxu0 0.0
    %1850 = vmatpush1.msra.mxu0 0.0
    %1851 = vmatprep.subr.mxu0 0.0
    %1852 = vmatpush1.msra.mxu0 0.0
    %1853 = vmatprep.subr.mxu0 0.0
    %1854 = vmatpush1.msra.mxu0 0.0
    %1855 = vmatprep.subr.mxu0 0.0
    %1856 = vmatpush1.msra.mxu0 0.0
    %1857 = vmatprep.subr.mxu0 0.0
    %1858 = vmatpush1.msra.mxu0 0.0
    %1859 = vmatprep.subr.mxu0 0.0
    %1860 = vmatpush1.msra.mxu0 0.0
    %1861 = vmatprep.subr.mxu0 0.0
    %1862 = vmatpush1.msra.mxu0 0.0
    %1863 = vmatprep.subr.mxu0 0.0
    %1864 = vmatpush1.msra.mxu0 0.0
    %1865 = vmatprep.subr.mxu0 0.0
    %1866 = vmatpush1.msra.mxu0 0.0
    %1867 = vmatprep.subr.mxu0 0.0
    %1868 = vmatpush1.msra.mxu0 0.0
    %1869 = vmatprep.mubr.f32.mxu0 0.0
    %1870 = vmatmul.mubr.f32.gmra.mrb[0].mxu0 %v1803
    %v1871 = vpop.f32.mrb[0].mxu0
    %v1872 = vadd.f32 0.0, %v1871
    %v1873 = vpop.f32.mrb[0].mxu0
    %1874 = vdwg.mxu0
    %v1876 = vrot.slane %v1802, 5
    %v1877 = vsel %vm402, %v1876, 0
    %1879 = vmatprep.subr.mxu0 0.0
    %1880 = vmatpush1.msra.mxu0 %v115
    %1881 = vmatprep.subr.mxu0 0.0
    %1882 = vmatpush1.msra.mxu0 0.0
    %1883 = vmatprep.subr.mxu0 0.0
    %1884 = vmatpush1.msra.mxu0 0.0
    %1885 = vmatprep.subr.mxu0 0.0
    %1886 = vmatpush1.msra.mxu0 0.0
    %1887 = vmatprep.subr.mxu0 0.0
    %1888 = vmatpush1.msra.mxu0 0.0
    %1889 = vmatprep.subr.mxu0 0.0
    %1890 = vmatpush1.msra.mxu0 0.0
    %1891 = vmatprep.subr.mxu0 0.0
    %1892 = vmatpush1.msra.mxu0 0.0
    %1893 = vmatprep.subr.mxu0 0.0
    %1894 = vmatpush1.msra.mxu0 0.0
    %1895 = vmatprep.subr.mxu0 0.0
    %1896 = vmatpush1.msra.mxu0 0.0
    %1897 = vmatprep.subr.mxu0 0.0
    %1898 = vmatpush1.msra.mxu0 0.0
    %1899 = vmatprep.subr.mxu0 0.0
    %1900 = vmatpush1.msra.mxu0 0.0
    %1901 = vmatprep.subr.mxu0 0.0
    %1902 = vmatpush1.msra.mxu0 0.0
    %1903 = vmatprep.subr.mxu0 0.0
    %1904 = vmatpush1.msra.mxu0 0.0
    %1905 = vmatprep.subr.mxu0 0.0
    %1906 = vmatpush1.msra.mxu0 0.0
    %1907 = vmatprep.subr.mxu0 0.0
    %1908 = vmatpush1.msra.mxu0 0.0
    %1909 = vmatprep.subr.mxu0 0.0
    %1910 = vmatpush1.msra.mxu0 0.0
    %1911 = vmatprep.subr.mxu0 0.0
    %1912 = vmatpush1.msra.mxu0 0.0
    %1913 = vmatprep.subr.mxu0 0.0
    %1914 = vmatpush1.msra.mxu0 0.0
    %1915 = vmatprep.subr.mxu0 0.0
    %1916 = vmatpush1.msra.mxu0 0.0
    %1917 = vmatprep.subr.mxu0 0.0
    %1918 = vmatpush1.msra.mxu0 0.0
    %1919 = vmatprep.subr.mxu0 0.0
    %1920 = vmatpush1.msra.mxu0 0.0
    %1921 = vmatprep.subr.mxu0 0.0
    %1922 = vmatpush1.msra.mxu0 0.0
    %1923 = vmatprep.subr.mxu0 0.0
    %1924 = vmatpush1.msra.mxu0 0.0
    %1925 = vmatprep.subr.mxu0 0.0
    %1926 = vmatpush1.msra.mxu0 0.0
    %1927 = vmatprep.subr.mxu0 0.0
    %1928 = vmatpush1.msra.mxu0 0.0
    %1929 = vmatprep.subr.mxu0 0.0
    %1930 = vmatpush1.msra.mxu0 0.0
    %1931 = vmatprep.subr.mxu0 0.0
    %1932 = vmatpush1.msra.mxu0 0.0
    %1933 = vmatprep.subr.mxu0 0.0
    %1934 = vmatpush1.msra.mxu0 0.0
    %1935 = vmatprep.subr.mxu0 0.0
    %1936 = vmatpush1.msra.mxu0 0.0
    %1937 = vmatprep.subr.mxu0 0.0
    %1938 = vmatpush1.msra.mxu0 0.0
    %1939 = vmatprep.subr.mxu0 0.0
    %1940 = vmatpush1.msra.mxu0 0.0
    %1941 = vmatprep.subr.mxu0 0.0
    %1942 = vmatpush1.msra.mxu0 0.0
    %1943 = vmatprep.mubr.f32.mxu0 0.0
    %1944 = vmatmul.mubr.f32.gmra.mrb[0].mxu0 %v1877
    %v1945 = vpop.f32.mrb[0].mxu0
    %v1946 = vadd.f32 0.0, %v1945
    %v1947 = vpop.f32.mrb[0].mxu0
    %1948 = vdwg.mxu0
    %v1949 = vlaneseq
    %v1950 = vshrl.u32 %v1949, 7
    %v1951 = vsub.s32 0, %v1950
    %v1952 = vrot.slane %v1872, %v1951
    %v1953 = vmul.f32 %v1604, %v1952
    %v1954 = vmul.f32 %v1609, %v1952
    %v1955 = vmul.f32 %v1614, %v1952
    %v1956 = vmul.f32 %v1619, %v1952
    %v1957 = vlaneseq
    %v1958 = vshrl.u32 %v1957, 7
    %v1959 = vsub.s32 0, %v1958
    %v1960 = vrot.slane %v1946, %v1959
    %v1961 = vadd.f32 %v1953, %v1960
    %v1962 = vadd.f32 %v1954, %v1960
    %v1963 = vadd.f32 %v1955, %v1960
    %v1964 = vadd.f32 %v1956, %v1960
    %v1965 = vld [vmem:[#allocation6] sm:$0xff]
    %v1966 = vld [vmem:[#allocation6 + $0x8] sm:$0xff]
    %v1967 = vld [vmem:[#allocation6 + $0x10] sm:$0xff]
    %v1968 = vld [vmem:[#allocation6 + $0x18] sm:$0xff]
    %v1969 = vld [vmem:[%s5] sm:$0xff]
    %v1970 = vld [vmem:[%s5 + $0x8] sm:$0xff]
    %v1971 = vld [vmem:[%s5 + $0x10] sm:$0xff]
    %v1972 = vld [vmem:[%s5 + $0x18] sm:$0xff]
    %v1973 = vld [vmem:[%s5 + $0x20] sm:$0xff]
    %v1974 = vld [vmem:[%s5 + $0x28] sm:$0xff]
    %v1975 = vld [vmem:[%s5 + $0x30] sm:$0xff]
    %v1976 = vld [vmem:[%s5 + $0x38] sm:$0xff]
    %v1978 = vsel %vm128, %v1965, 0
    %v1981 = vsel %vm128, %v1966, 0
    %v1984 = vsel %vm128, %v1967, 0
    %v1987 = vsel %vm128, %v1968, 0
    %1989 = vmatprep.subr.mxu0 0.0
    %1990 = vmatpush1.msra.mxu0 %v1969
    %1991 = vmatprep.subr.mxu0 0.0
    %1992 = vmatpush1.msra.mxu0 %v1970
    %1993 = vmatprep.subr.mxu0 0.0
    %1994 = vmatpush1.msra.mxu0 %v1971
    %1995 = vmatprep.subr.mxu0 0.0
    %1996 = vmatpush1.msra.mxu0 %v1972
    %1997 = vmatprep.subr.mxu0 0.0
    %1998 = vmatpush1.msra.mxu0 %v1973
    %1999 = vmatprep.subr.mxu0 0.0
    %2000 = vmatpush1.msra.mxu0 %v1974
    %2001 = vmatprep.subr.mxu0 0.0
    %2002 = vmatpush1.msra.mxu0 %v1975
    %2003 = vmatprep.subr.mxu0 0.0
    %2004 = vmatpush1.msra.mxu0 %v1976
    %2005 = vmatprep.subr.mxu0 0.0
    %2006 = vmatpush1.msra.mxu0 0.0
    %2007 = vmatprep.subr.mxu0 0.0
    %2008 = vmatpush1.msra.mxu0 0.0
    %2009 = vmatprep.subr.mxu0 0.0
    %2010 = vmatpush1.msra.mxu0 0.0
    %2011 = vmatprep.subr.mxu0 0.0
    %2012 = vmatpush1.msra.mxu0 0.0
    %2013 = vmatprep.subr.mxu0 0.0
    %2014 = vmatpush1.msra.mxu0 0.0
    %2015 = vmatprep.subr.mxu0 0.0
    %2016 = vmatpush1.msra.mxu0 0.0
    %2017 = vmatprep.subr.mxu0 0.0
    %2018 = vmatpush1.msra.mxu0 0.0
    %2019 = vmatprep.subr.mxu0 0.0
    %2020 = vmatpush1.msra.mxu0 0.0
    %2021 = vmatprep.subr.mxu0 0.0
    %2022 = vmatpush1.msra.mxu0 0.0
    %2023 = vmatprep.subr.mxu0 0.0
    %2024 = vmatpush1.msra.mxu0 0.0
    %2025 = vmatprep.subr.mxu0 0.0
    %2026 = vmatpush1.msra.mxu0 0.0
    %2027 = vmatprep.subr.mxu0 0.0
    %2028 = vmatpush1.msra.mxu0 0.0
    %2029 = vmatprep.subr.mxu0 0.0
    %2030 = vmatpush1.msra.mxu0 0.0
    %2031 = vmatprep.subr.mxu0 0.0
    %2032 = vmatpush1.msra.mxu0 0.0
    %2033 = vmatprep.subr.mxu0 0.0
    %2034 = vmatpush1.msra.mxu0 0.0
    %2035 = vmatprep.subr.mxu0 0.0
    %2036 = vmatpush1.msra.mxu0 0.0
    %2037 = vmatprep.subr.mxu0 0.0
    %2038 = vmatpush1.msra.mxu0 0.0
    %2039 = vmatprep.subr.mxu0 0.0
    %2040 = vmatpush1.msra.mxu0 0.0
    %2041 = vmatprep.subr.mxu0 0.0
    %2042 = vmatpush1.msra.mxu0 0.0
    %2043 = vmatprep.subr.mxu0 0.0
    %2044 = vmatpush1.msra.mxu0 0.0
    %2045 = vmatprep.subr.mxu0 0.0
    %2046 = vmatpush1.msra.mxu0 0.0
    %2047 = vmatprep.subr.mxu0 0.0
    %2048 = vmatpush1.msra.mxu0 0.0
    %2049 = vmatprep.subr.mxu0 0.0
    %2050 = vmatpush1.msra.mxu0 0.0
    %2051 = vmatprep.subr.mxu0 0.0
    %2052 = vmatpush1.msra.mxu0 0.0
    %2053 = vmatprep.mubr.f32.mxu0 0.0
    %2054 = vmatmul.mubr.f32.gmra.mrb[0].mxu0 %v1978
    %v2055 = vpop.f32.mrb[0].mxu0
    %v2056 = vadd.f32 0.0, %v2055
    %v2057 = vpop.f32.mrb[0].mxu0
    %2058 = vmatprep.mubr.f32.mxu0 0.0
    %2059 = vmatmul.mubr.f32.gmra.mrb[0].mxu0 %v1981
    %v2060 = vpop.f32.mrb[0].mxu0
    %v2061 = vadd.f32 0.0, %v2060
    %v2062 = vpop.f32.mrb[0].mxu0
    %2063 = vmatprep.mubr.f32.mxu0 0.0
    %2064 = vmatmul.mubr.f32.gmra.mrb[0].mxu0 %v1984
    %v2065 = vpop.f32.mrb[0].mxu0
    %v2066 = vadd.f32 0.0, %v2065
    %v2067 = vpop.f32.mrb[0].mxu0
    %2068 = vmatprep.mubr.f32.mxu0 0.0
    %2069 = vmatmul.mubr.f32.gmra.mrb[0].mxu0 %v1987
    %v2070 = vpop.f32.mrb[0].mxu0
    %v2071 = vadd.f32 0.0, %v2070
    %v2072 = vpop.f32.mrb[0].mxu0
    %2073 = vdwg.mxu0
    %v2074 = vadd.f32 %v2056, %v2061
    %v2075 = vadd.f32 %v2074, %v2066
    %v2076 = vadd.f32 %v2075, %v2071
    %v2077 = vrot.slane %v2076, 4
    %v2078 = vadd.f32 %v2076, %v2077
    %v2079 = vrot.slane %v2078, 2
    %v2080 = vadd.f32 %v2078, %v2079
    %v2081 = vrot.slane %v2080, 1
    %v2082 = vadd.f32 %v2080, %v2081
    %v2083 = vmul.f32 %v2056, %v2056
    %v2084 = vmul.f32 %v2061, %v2061
    %v2085 = vmul.f32 %v2066, %v2066
    %v2086 = vmul.f32 %v2071, %v2071
    %v2087 = vadd.f32 %v2083, %v2084
    %v2088 = vadd.f32 %v2087, %v2085
    %v2089 = vadd.f32 %v2088, %v2086
    %v2090 = vrot.slane %v2089, 4
    %v2091 = vadd.f32 %v2089, %v2090
    %v2092 = vrot.slane %v2091, 2
    %v2093 = vadd.f32 %v2091, %v2092
    %v2094 = vrot.slane %v2093, 1
    %v2095 = vadd.f32 %v2093, %v2094
    %2096 = vmatprep.subr.mxu0 0.0
    %2097 = vmatpush1.msra.mxu0 %v99
    %2098 = vmatprep.subr.mxu0 0.0
    %2099 = vmatpush1.msra.mxu0 %v100
    %2100 = vmatprep.subr.mxu0 0.0
    %2101 = vmatpush1.msra.mxu0 %v101
    %2102 = vmatprep.subr.mxu0 0.0
    %2103 = vmatpush1.msra.mxu0 %v102
    %2104 = vmatprep.subr.mxu0 0.0
    %2105 = vmatpush1.msra.mxu0 %v103
    %2106 = vmatprep.subr.mxu0 0.0
    %2107 = vmatpush1.msra.mxu0 %v104
    %2108 = vmatprep.subr.mxu0 0.0
    %2109 = vmatpush1.msra.mxu0 %v105
    %2110 = vmatprep.subr.mxu0 0.0
    %2111 = vmatpush1.msra.mxu0 %v106
    %2112 = vmatprep.subr.mxu0 0.0
    %2113 = vmatpush1.msra.mxu0 %v107
    %2114 = vmatprep.subr.mxu0 0.0
    %2115 = vmatpush1.msra.mxu0 %v108
    %2116 = vmatprep.subr.mxu0 0.0
    %2117 = vmatpush1.msra.mxu0 %v109
    %2118 = vmatprep.subr.mxu0 0.0
    %2119 = vmatpush1.msra.mxu0 %v110
    %2120 = vmatprep.subr.mxu0 0.0
    %2121 = vmatpush1.msra.mxu0 %v111
    %2122 = vmatprep.subr.mxu0 0.0
    %2123 = vmatpush1.msra.mxu0 %v112
    %2124 = vmatprep.subr.mxu0 0.0
    %2125 = vmatpush1.msra.mxu0 %v113
    %2126 = vmatprep.subr.mxu0 0.0
    %2127 = vmatpush1.msra.mxu0 %v114
    %2128 = vmatprep.subr.mxu0 0.0
    %2129 = vmatpush1.msra.mxu0 0.0
    %2130 = vmatprep.subr.mxu0 0.0
    %2131 = vmatpush1.msra.mxu0 0.0
    %2132 = vmatprep.subr.mxu0 0.0
    %2133 = vmatpush1.msra.mxu0 0.0
    %2134 = vmatprep.subr.mxu0 0.0
    %2135 = vmatpush1.msra.mxu0 0.0
    %2136 = vmatprep.subr.mxu0 0.0
    %2137 = vmatpush1.msra.mxu0 0.0
    %2138 = vmatprep.subr.mxu0 0.0
    %2139 = vmatpush1.msra.mxu0 0.0
    %2140 = vmatprep.subr.mxu0 0.0
    %2141 = vmatpush1.msra.mxu0 0.0
    %2142 = vmatprep.subr.mxu0 0.0
    %2143 = vmatpush1.msra.mxu0 0.0
    %2144 = vmatprep.subr.mxu0 0.0
    %2145 = vmatpush1.msra.mxu0 0.0
    %2146 = vmatprep.subr.mxu0 0.0
    %2147 = vmatpush1.msra.mxu0 0.0
    %2148 = vmatprep.subr.mxu0 0.0
    %2149 = vmatpush1.msra.mxu0 0.0
    %2150 = vmatprep.subr.mxu0 0.0
    %2151 = vmatpush1.msra.mxu0 0.0
    %2152 = vmatprep.subr.mxu0 0.0
    %2153 = vmatpush1.msra.mxu0 0.0
    %2154 = vmatprep.subr.mxu0 0.0
    %2155 = vmatpush1.msra.mxu0 0.0
    %2156 = vmatprep.subr.mxu0 0.0
    %2157 = vmatpush1.msra.mxu0 0.0
    %2158 = vmatprep.subr.mxu0 0.0
    %2159 = vmatpush1.msra.mxu0 0.0
    %2160 = vmatprep.mubr.f32.mxu0 0.0
    %2161 = vmatmul.mubr.f32.gmra.mrb[0].mxu0 %v2082
    %v2162 = vpop.f32.mrb[0].mxu0
    %v2163 = vadd.f32 0.0, %v2162
    %v2164 = vpop.f32.mrb[0].mxu0
    %2165 = vdwg.mxu0
    %2166 = vmatprep.subr.mxu0 0.0
    %2167 = vmatpush1.msra.mxu0 %v99
    %2168 = vmatprep.subr.mxu0 0.0
    %2169 = vmatpush1.msra.mxu0 %v100
    %2170 = vmatprep.subr.mxu0 0.0
    %2171 = vmatpush1.msra.mxu0 %v101
    %2172 = vmatprep.subr.mxu0 0.0
    %2173 = vmatpush1.msra.mxu0 %v102
    %2174 = vmatprep.subr.mxu0 0.0
    %2175 = vmatpush1.msra.mxu0 %v103
    %2176 = vmatprep.subr.mxu0 0.0
    %2177 = vmatpush1.msra.mxu0 %v104
    %2178 = vmatprep.subr.mxu0 0.0
    %2179 = vmatpush1.msra.mxu0 %v105
    %2180 = vmatprep.subr.mxu0 0.0
    %2181 = vmatpush1.msra.mxu0 %v106
    %2182 = vmatprep.subr.mxu0 0.0
    %2183 = vmatpush1.msra.mxu0 %v107
    %2184 = vmatprep.subr.mxu0 0.0
    %2185 = vmatpush1.msra.mxu0 %v108
    %2186 = vmatprep.subr.mxu0 0.0
    %2187 = vmatpush1.msra.mxu0 %v109
    %2188 = vmatprep.subr.mxu0 0.0
    %2189 = vmatpush1.msra.mxu0 %v110
    %2190 = vmatprep.subr.mxu0 0.0
    %2191 = vmatpush1.msra.mxu0 %v111
    %2192 = vmatprep.subr.mxu0 0.0
    %2193 = vmatpush1.msra.mxu0 %v112
    %2194 = vmatprep.subr.mxu0 0.0
    %2195 = vmatpush1.msra.mxu0 %v113
    %2196 = vmatprep.subr.mxu0 0.0
    %2197 = vmatpush1.msra.mxu0 %v114
    %2198 = vmatprep.subr.mxu0 0.0
    %2199 = vmatpush1.msra.mxu0 0.0
    %2200 = vmatprep.subr.mxu0 0.0
    %2201 = vmatpush1.msra.mxu0 0.0
    %2202 = vmatprep.subr.mxu0 0.0
    %2203 = vmatpush1.msra.mxu0 0.0
    %2204 = vmatprep.subr.mxu0 0.0
    %2205 = vmatpush1.msra.mxu0 0.0
    %2206 = vmatprep.subr.mxu0 0.0
    %2207 = vmatpush1.msra.mxu0 0.0
    %2208 = vmatprep.subr.mxu0 0.0
    %2209 = vmatpush1.msra.mxu0 0.0
    %2210 = vmatprep.subr.mxu0 0.0
    %2211 = vmatpush1.msra.mxu0 0.0
    %2212 = vmatprep.subr.mxu0 0.0
    %2213 = vmatpush1.msra.mxu0 0.0
    %2214 = vmatprep.subr.mxu0 0.0
    %2215 = vmatpush1.msra.mxu0 0.0
    %2216 = vmatprep.subr.mxu0 0.0
    %2217 = vmatpush1.msra.mxu0 0.0
    %2218 = vmatprep.subr.mxu0 0.0
    %2219 = vmatpush1.msra.mxu0 0.0
    %2220 = vmatprep.subr.mxu0 0.0
    %2221 = vmatpush1.msra.mxu0 0.0
    %2222 = vmatprep.subr.mxu0 0.0
    %2223 = vmatpush1.msra.mxu0 0.0
    %2224 = vmatprep.subr.mxu0 0.0
    %2225 = vmatpush1.msra.mxu0 0.0
    %2226 = vmatprep.subr.mxu0 0.0
    %2227 = vmatpush1.msra.mxu0 0.0
    %2228 = vmatprep.subr.mxu0 0.0
    %2229 = vmatpush1.msra.mxu0 0.0
    %2230 = vmatprep.mubr.f32.mxu0 0.0
    %2231 = vmatmul.mubr.f32.gmra.mrb[0].mxu0 %v2095
    %v2232 = vpop.f32.mrb[0].mxu0
    %v2233 = vadd.f32 0.0, %v2232
    %v2234 = vpop.f32.mrb[0].mxu0
    %2235 = vdwg.mxu0
    %v2236 = vmul.f32 %v2163, %v388
    %v2237 = vmul.f32 %v2233, %v388
    %v2238 = vmul.f32 %v2236, %v2236
    %v2239 = vsub.f32 %v2237, %v2238
    %v2240 = vmax.f32 %v2239, 0.0
    %v2241 = vadd.f32 %v2240, 1e-05
    %v2242 = vrsqrt.pop %v2241
    %v2244 = vrot.slane %v2242, 2
    %v2246 = vmul.f32 %v80, %v2244
    %v2248 = vrot.slane %v2246, 6
    %v2250 = vmul.f32 %v2236, %v2248
    %v2252 = vrot.slane %v2250, 1
    %v2254 = vsub.f32 %v80, %v2252
    %v2255 = vsel %vm402, %v2248, 0
    %2257 = vmatprep.subr.mxu0 0.0
    %2258 = vmatpush1.msra.mxu0 %v115
    %2259 = vmatprep.subr.mxu0 0.0
    %2260 = vmatpush1.msra.mxu0 0.0
    %2261 = vmatprep.subr.mxu0 0.0
    %2262 = vmatpush1.msra.mxu0 0.0
    %2263 = vmatprep.subr.mxu0 0.0
    %2264 = vmatpush1.msra.mxu0 0.0
    %2265 = vmatprep.subr.mxu0 0.0
    %2266 = vmatpush1.msra.mxu0 0.0
    %2267 = vmatprep.subr.mxu0 0.0
    %2268 = vmatpush1.msra.mxu0 0.0
    %2269 = vmatprep.subr.mxu0 0.0
    %2270 = vmatpush1.msra.mxu0 0.0
    %2271 = vmatprep.subr.mxu0 0.0
    %2272 = vmatpush1.msra.mxu0 0.0
    %2273 = vmatprep.subr.mxu0 0.0
    %2274 = vmatpush1.msra.mxu0 0.0
    %2275 = vmatprep.subr.mxu0 0.0
    %2276 = vmatpush1.msra.mxu0 0.0
    %2277 = vmatprep.subr.mxu0 0.0
    %2278 = vmatpush1.msra.mxu0 0.0
    %2279 = vmatprep.subr.mxu0 0.0
    %2280 = vmatpush1.msra.mxu0 0.0
    %2281 = vmatprep.subr.mxu0 0.0
    %2282 = vmatpush1.msra.mxu0 0.0
    %2283 = vmatprep.subr.mxu0 0.0
    %2284 = vmatpush1.msra.mxu0 0.0
    %2285 = vmatprep.subr.mxu0 0.0
    %2286 = vmatpush1.msra.mxu0 0.0
    %2287 = vmatprep.subr.mxu0 0.0
    %2288 = vmatpush1.msra.mxu0 0.0
    %2289 = vmatprep.subr.mxu0 0.0
    %2290 = vmatpush1.msra.mxu0 0.0
    %2291 = vmatprep.subr.mxu0 0.0
    %2292 = vmatpush1.msra.mxu0 0.0
    %2293 = vmatprep.subr.mxu0 0.0
    %2294 = vmatpush1.msra.mxu0 0.0
    %2295 = vmatprep.subr.mxu0 0.0
    %2296 = vmatpush1.msra.mxu0 0.0
    %2297 = vmatprep.subr.mxu0 0.0
    %2298 = vmatpush1.msra.mxu0 0.0
    %2299 = vmatprep.subr.mxu0 0.0
    %2300 = vmatpush1.msra.mxu0 0.0
    %2301 = vmatprep.subr.mxu0 0.0
    %2302 = vmatpush1.msra.mxu0 0.0
    %2303 = vmatprep.subr.mxu0 0.0
    %2304 = vmatpush1.msra.mxu0 0.0
    %2305 = vmatprep.subr.mxu0 0.0
    %2306 = vmatpush1.msra.mxu0 0.0
    %2307 = vmatprep.subr.mxu0 0.0
    %2308 = vmatpush1.msra.mxu0 0.0
    %2309 = vmatprep.subr.mxu0 0.0
    %2310 = vmatpush1.msra.mxu0 0.0
    %2311 = vmatprep.subr.mxu0 0.0
    %2312 = vmatpush1.msra.mxu0 0.0
    %2313 = vmatprep.subr.mxu0 0.0
    %2314 = vmatpush1.msra.mxu0 0.0
    %2315 = vmatprep.subr.mxu0 0.0
    %2316 = vmatpush1.msra.mxu0 0.0
    %2317 = vmatprep.subr.mxu0 0.0
    %2318 = vmatpush1.msra.mxu0 0.0
    %2319 = vmatprep.subr.mxu0 0.0
    %2320 = vmatpush1.msra.mxu0 0.0
    %2321 = vmatprep.mubr.f32.mxu0 0.0
    %2322 = vmatmul.mubr.f32.gmra.mrb[0].mxu0 %v2255
    %v2323 = vpop.f32.mrb[0].mxu0
    %v2324 = vadd.f32 0.0, %v2323
    %v2325 = vpop.f32.mrb[0].mxu0
    %2326 = vdwg.mxu0
    %v2328 = vrot.slane %v2254, 7
    %v2329 = vsel %vm402, %v2328, 0
    %2331 = vmatprep.subr.mxu0 0.0
    %2332 = vmatpush1.msra.mxu0 %v115
    %2333 = vmatprep.subr.mxu0 0.0
    %2334 = vmatpush1.msra.mxu0 0.0
    %2335 = vmatprep.subr.mxu0 0.0
    %2336 = vmatpush1.msra.mxu0 0.0
    %2337 = vmatprep.subr.mxu0 0.0
    %2338 = vmatpush1.msra.mxu0 0.0
    %2339 = vmatprep.subr.mxu0 0.0
    %2340 = vmatpush1.msra.mxu0 0.0
    %2341 = vmatprep.subr.mxu0 0.0
    %2342 = vmatpush1.msra.mxu0 0.0
    %2343 = vmatprep.subr.mxu0 0.0
    %2344 = vmatpush1.msra.mxu0 0.0
    %2345 = vmatprep.subr.mxu0 0.0
    %2346 = vmatpush1.msra.mxu0 0.0
    %2347 = vmatprep.subr.mxu0 0.0
    %2348 = vmatpush1.msra.mxu0 0.0
    %2349 = vmatprep.subr.mxu0 0.0
    %2350 = vmatpush1.msra.mxu0 0.0
    %2351 = vmatprep.subr.mxu0 0.0
    %2352 = vmatpush1.msra.mxu0 0.0
    %2353 = vmatprep.subr.mxu0 0.0
    %2354 = vmatpush1.msra.mxu0 0.0
    %2355 = vmatprep.subr.mxu0 0.0
    %2356 = vmatpush1.msra.mxu0 0.0
    %2357 = vmatprep.subr.mxu0 0.0
    %2358 = vmatpush1.msra.mxu0 0.0
    %2359 = vmatprep.subr.mxu0 0.0
    %2360 = vmatpush1.msra.mxu0 0.0
    %2361 = vmatprep.subr.mxu0 0.0
    %2362 = vmatpush1.msra.mxu0 0.0
    %2363 = vmatprep.subr.mxu0 0.0
    %2364 = vmatpush1.msra.mxu0 0.0
    %2365 = vmatprep.subr.mxu0 0.0
    %2366 = vmatpush1.msra.mxu0 0.0
    %2367 = vmatprep.subr.mxu0 0.0
    %2368 = vmatpush1.msra.mxu0 0.0
    %2369 = vmatprep.subr.mxu0 0.0
    %2370 = vmatpush1.msra.mxu0 0.0
    %2371 = vmatprep.subr.mxu0 0.0
    %2372 = vmatpush1.msra.mxu0 0.0
    %2373 = vmatprep.subr.mxu0 0.0
    %2374 = vmatpush1.msra.mxu0 0.0
    %2375 = vmatprep.subr.mxu0 0.0
    %2376 = vmatpush1.msra.mxu0 0.0
    %2377 = vmatprep.subr.mxu0 0.0
    %2378 = vmatpush1.msra.mxu0 0.0
    %2379 = vmatprep.subr.mxu0 0.0
    %2380 = vmatpush1.msra.mxu0 0.0
    %2381 = vmatprep.subr.mxu0 0.0
    %2382 = vmatpush1.msra.mxu0 0.0
    %2383 = vmatprep.subr.mxu0 0.0
    %2384 = vmatpush1.msra.mxu0 0.0
    %2385 = vmatprep.subr.mxu0 0.0
    %2386 = vmatpush1.msra.mxu0 0.0
    %2387 = vmatprep.subr.mxu0 0.0
    %2388 = vmatpush1.msra.mxu0 0.0
    %2389 = vmatprep.subr.mxu0 0.0
    %2390 = vmatpush1.msra.mxu0 0.0
    %2391 = vmatprep.subr.mxu0 0.0
    %2392 = vmatpush1.msra.mxu0 0.0
    %2393 = vmatprep.subr.mxu0 0.0
    %2394 = vmatpush1.msra.mxu0 0.0
    %2395 = vmatprep.mubr.f32.mxu0 0.0
    %2396 = vmatmul.mubr.f32.gmra.mrb[0].mxu0 %v2329
    %v2397 = vpop.f32.mrb[0].mxu0
    %v2398 = vadd.f32 0.0, %v2397
    %v2399 = vpop.f32.mrb[0].mxu0
    %2400 = vdwg.mxu0
    %v2401 = vlaneseq
    %v2402 = vshrl.u32 %v2401, 7
    %v2403 = vsub.s32 0, %v2402
    %v2404 = vrot.slane %v2324, %v2403
    %v2405 = vmul.f32 %v2056, %v2404
    %v2406 = vmul.f32 %v2061, %v2404
    %v2407 = vmul.f32 %v2066, %v2404
    %v2408 = vmul.f32 %v2071, %v2404
    %v2409 = vlaneseq
    %v2410 = vshrl.u32 %v2409, 7
    %v2411 = vsub.s32 0, %v2410
    %v2412 = vrot.slane %v2398, %v2411
    %v2413 = vadd.f32 %v2405, %v2412
    %v2414 = vadd.f32 %v2406, %v2412
    %v2415 = vadd.f32 %v2407, %v2412
    %v2416 = vadd.f32 %v2408, %v2412
    %v2417 = vadd.f32 %v1961, %v2413
    %v2418 = vadd.f32 %v1962, %v2414
    %v2419 = vadd.f32 %v1963, %v2415
    %v2420 = vadd.f32 %v1964, %v2416
    %v2421 = vmax.f32 %v2417, 0.0
    %v2422 = vmax.f32 %v2418, 0.0
    %v2423 = vmax.f32 %v2419, 0.0
    %v2424 = vmax.f32 %v2420, 0.0
    %v2425 = vmin.f32 %v2421, 6.0
    %v2426 = vmin.f32 %v2422, 6.0
    %v2427 = vmin.f32 %v2423, 6.0
    %v2428 = vmin.f32 %v2424, 6.0
    %2429 = vst [vmem:[#allocation9] sm:$0xff] %v2425
    %2430 = vst [vmem:[#allocation9 + $0x8] sm:$0xff] %v2426
    %2431 = vst [vmem:[#allocation9 + $0x10] sm:$0xff] %v2427
    %2432 = vst [vmem:[#allocation9 + $0x18] sm:$0xff] %v2428
    // Predicated region
    $region58: #{tpu_custom_call.1} parent=1 // pred_check
      _
    $region59: #{tpu_custom_call.1} parent=1 // pred_check_branch
      %2434 = sbr.rel (0) target = $region61
    $region60: #{tpu_custom_call.1} parent=1 // pred_region
      %s2436 = ssub.s32 512, 512
      %2437 = vsyncadd [#allocation5], %s2436
      %s2438 = sshll.u32 [#allocation9], 4
      %s2439 = int_to_ptr.vmem [resolvable:$true] %s2438
      %2444 = dma.vmem_to_hbm [thread:$0]  %s2439, 512, %s11, [#allocation5], 128, 128, 8
    $region61: #{tpu_custom_call.1} parent=1 // pred_fallthru
      _
    // Predicated region
    $region62: #{tpu_custom_call.1} parent=1 // pred_check
      _
    $region63: #{tpu_custom_call.1} parent=1 // pred_check_branch
      %2446 = sbr.rel (0) target = $region65
    $region64: #{tpu_custom_call.1} parent=1 // pred_region
      %2447 = dma.done [#allocation5], 512
    $region65: #{tpu_custom_call.1} parent=1 // pred_fallthru
      _
    %2448 = vsyncpa [#allocation4], 1
    %2449 = vsyncpa [#allocation7], 1
    %2450 = vsyncpa [#allocation5], 1

</llo_original>
